<compile_context>
chip_gen: v7x
topology: tpu7x:2x2x1
jax: 0.10.0
libtpu: 0.0.40
codegen_flags: <defaults>
</compile_context>

<pallas_src>
import jax
import jax.numpy as jnp
from jax.experimental import pallas as pl
from jax.experimental.pallas import tpu as pltpu

K = 3  # kernel size of all three Conv1d layers


# ----------------------------------------------------------------------------
# Fused kernel
# ----------------------------------------------------------------------------
def gating5_fused_kernel(x_ref,
                         w1_ref, s1_ref, t1_ref,
                         w2_ref, s2_ref, t2_ref,
                         w3_ref, s3_ref, t3_ref,
                         wl1_hbm, sl1_ref, tl1_ref,
                         wl2_hbm, sl2_ref, tl2_ref,
                         wl3_ref, bl3_ref,
                         o_ref,
                         zflat_ref, wl1_vmem, wl2_vmem,
                         pool1_ref, pool2_ref, pool3_ref, dma_sems):
    # Kick off the big MLP-weight DMAs immediately so they overlap the conv
    # stage (everything else is small and auto-copied before the body runs).
    cp_wl1 = pltpu.make_async_copy(wl1_hbm, wl1_vmem, dma_sems.at[0])
    cp_wl2 = pltpu.make_async_copy(wl2_hbm, wl2_vmem, dma_sems.at[1])
    cp_wl1.start()
    cp_wl2.start()

    B = zflat_ref.shape[0]
    C3 = pool3_ref.shape[1]
    L3 = zflat_ref.shape[1] // C3
    L = x_ref.shape[0] // B            # per-sample input length (multiple of 8)
    P3 = L // 8                        # per-sample padded length after 3 pools

    def conv_bn_relu_pool(h, w_ref, scale, shift, y_scr):
        """K-tap valid Conv1d (one im2col matmul) + folded BN/bias + ReLU +
        MaxPool1d(2,2).  `h` is (rows, Cin) channels-last with all B samples
        stacked along sublanes; garbage tail rows of each per-sample segment
        stay garbage and are never consumed by later stages."""
        rows = h.shape[0]
        # im2col: K sublane rotations (XLU) concatenated along lanes, so the
        # single MXU matmul sees an 8-aligned, unsliced LHS.
        taps = [h] + [pltpu.roll(h, rows - k, axis=0) for k in range(1, K)]
        lhs = jnp.concatenate(taps, axis=1)                      # (rows, K*Cin)
        y = jnp.dot(lhs, w_ref[...], preferred_element_type=jnp.float32)
        y_scr[...] = jnp.maximum(y * scale + shift, 0.0)         # folded BN + ReLU
        # MaxPool1d(2, 2): strided even/odd sublane loads, no interleaved reshape.
        half = rows // 2
        return jnp.maximum(y_scr[pl.ds(0, half, stride=2), :],
                           y_scr[pl.ds(1, half, stride=2), :])   # (rows//2, Cout)

    h = conv_bn_relu_pool(x_ref[...], w1_ref, s1_ref[...], t1_ref[...], pool1_ref)
    h = conv_bn_relu_pool(h, w2_ref, s2_ref[...], t2_ref[...], pool2_ref)
    h = conv_bn_relu_pool(h, w3_ref, s3_ref[...], t3_ref[...], pool3_ref)
    # h: (B * P3, C3); rows [b*P3, b*P3 + L3) are the valid conv3 outputs.

    # Flatten the L3 valid rows of each sample into a lane-dense (B, L3*C3) row
    # so linear1 runs ONCE for the batch with the full 768-deep contraction.
    # (The PyTorch NCL flatten permutation is folded into wl1 offline.)
    for b in range(B):
        for l in range(L3):
            r = b * P3 + l
            zflat_ref[b:b + 1, l * C3:(l + 1) * C3] = h[r:r + 1, :]

    # ---- MLP head: batched matmuls, bf16 operands, f32 accumulation ----
    cp_wl1.wait()
    z = jnp.dot(zflat_ref[...].astype(jnp.bfloat16), wl1_vmem[...],
                preferred_element_type=jnp.float32)              # (B, 512)
    z = jnp.maximum(z * sl1_ref[...] + tl1_ref[...], 0.0)        # linear_bn1 + ReLU

    cp_wl2.wait()
    z = jnp.dot(z.astype(jnp.bfloat16), wl2_vmem[...],
                preferred_element_type=jnp.float32)              # (B, 512)
    z = jnp.maximum(z * sl2_ref[...] + tl2_ref[...], 0.0)        # linear_bn2 + ReLU

    logits = jnp.dot(z.astype(jnp.bfloat16), wl3_ref[...],
                     preferred_element_type=jnp.float32) + bl3_ref[...]
    logits = logits - jnp.max(logits, axis=-1, keepdims=True)    # softmax(dim=1)
    e = jnp.exp(logits)
    o_ref[...] = e / jnp.sum(e, axis=-1, keepdims=True)


# ----------------------------------------------------------------------------
# Wrapper
# ----------------------------------------------------------------------------
def gating5_forward(x_ncl, params):
    """x_ncl: (B, 5, L) float32, exactly as the PyTorch module receives it."""
    B, Cin, L = x_ncl.shape
    assert L % 8 == 0, "kernel assumes the conv length is a multiple of 8"
    # Channels-last, all samples stacked along the sublane axis: (B*L, Cin).
    x = jnp.transpose(x_ncl, (0, 2, 1)).astype(jnp.float32).reshape(B * L, Cin)

    C1 = params["w1"].shape[1]
    C2 = params["w2"].shape[1]
    C3 = params["w3"].shape[1]
    Dflat, D1 = params["wl1"].shape
    D2 = params["wl2"].shape[1]
    n_cls = params["wl3"].shape[1]

    args = (x,
            params["w1"], params["s1"], params["t1"],
            params["w2"], params["s2"], params["t2"],
            params["w3"], params["s3"], params["t3"],
            params["wl1"], params["sl1"], params["tl1"],
            params["wl2"], params["sl2"], params["tl2"],
            params["wl3"], params["bl3"])

    vmem = pl.BlockSpec(memory_space=pltpu.MemorySpace.VMEM)
    anyspace = pl.BlockSpec(memory_space=pl.ANY)   # manually DMA'd, overlapped
    in_specs = [vmem] * len(args)
    in_specs[10] = anyspace   # wl1 (bf16)
    in_specs[13] = anyspace   # wl2 (bf16)

    flops = 2 * B * (L * K * Cin * C1 + (L // 2) * K * C1 * C2
                     + (L // 4) * K * C2 * C3
                     + Dflat * D1 + D1 * D2 + D2 * n_cls)
    bytes_accessed = int(sum(int(a.size) * a.dtype.itemsize for a in args)
                         + B * n_cls * 4)

    out = pl.pallas_call(
        gating5_fused_kernel,
        out_shape=jax.ShapeDtypeStruct((B, n_cls), jnp.float32),
        in_specs=in_specs,
        out_specs=vmem,
        scratch_shapes=[
            pltpu.VMEM((B, Dflat), jnp.float32),                  # flat conv3 out
            pltpu.VMEM(params["wl1"].shape, params["wl1"].dtype),  # wl1 landing buf
            pltpu.VMEM(params["wl2"].shape, params["wl2"].dtype),  # wl2 landing buf
            pltpu.VMEM((B * L, C1), jnp.float32),                 # conv1 activations
            pltpu.VMEM((B * L // 2, C2), jnp.float32),            # conv2 activations
            pltpu.VMEM((B * L // 4, C3), jnp.float32),            # conv3 activations
            pltpu.SemaphoreType.DMA((2,)),
        ],
        cost_estimate=pl.CostEstimate(flops=int(flops),
                                      transcendentals=B * n_cls,
                                      bytes_accessed=bytes_accessed),
    )(*args)
    return out.reshape(-1, n_cls)


# ----------------------------------------------------------------------------
# Offline parameter folding (zero runtime cost)
# ----------------------------------------------------------------------------
def fold_bn(gamma, beta, running_mean, running_var, bias, eps=1e-5):
    """Fold eval-mode BatchNorm1d + the preceding conv/linear bias into a
    per-channel scale/shift:  BN(xW + bias) == scale * (xW) + shift."""
    scale = gamma / jnp.sqrt(running_var + eps)
    shift = beta + (bias - running_mean) * scale
    return scale[None, :].astype(jnp.float32), shift[None, :].astype(jnp.float32)


def fold_conv_weight(w_k_cin_cout):
    """(K, Cin, Cout) -> im2col layout (K*Cin, Cout), row index = k*Cin + c."""
    k, cin, cout = w_k_cin_cout.shape
    return w_k_cin_cout.reshape(k * cin, cout).astype(jnp.float32)


def fold_flatten_into_wl1(wl1_xw, c3, l3):
    """wl1_xw: (c3*l3, D1) with rows ordered like PyTorch's x.view(B, -1) on an
    NCL tensor (row = c*l3 + l).  Re-order rows to the kernel's channels-last
    flatten (row = l*c3 + c) and cast to bf16."""
    d1 = wl1_xw.shape[1]
    w = jnp.transpose(wl1_xw.reshape(c3, l3, d1), (1, 0, 2)).reshape(l3 * c3, d1)
    return w.astype(jnp.bfloat16)


def after_cnn_len(L):
    for _ in range(3):
        L = (L - 2) // 2
    return L


# ----------------------------------------------------------------------------
# Pure-XLA reference: PyTorch semantics with UN-folded BatchNorm (eval mode)
# ----------------------------------------------------------------------------
def gating5_reference(x_ncl, raw, eps=1e-5):
    hi = jax.lax.Precision.HIGHEST
    x = jnp.transpose(x_ncl, (0, 2, 1))

    def bn(y, g, b, m, v):
        return (y - m) / jnp.sqrt(v + eps) * g + b

    def block(h, w, bias, g, be, m, v):
        kk = w.shape[0]
        Lc = h.shape[1] - kk + 1
        acc = sum(jnp.einsum("blc,cd->bld", h[:, k:k + Lc, :], w[k], precision=hi)
                  for k in range(kk)) + bias
        y = jnp.maximum(bn(acc, g, be, m, v), 0.0)
        Lp = Lc // 2
        y = y[:, :2 * Lp, :].reshape(y.shape[0], Lp, 2, -1)
        return jnp.max(y, axis=2)

    h = block(x, raw["w1"], raw["b1"], raw["g1"], raw["be1"], raw["m1"], raw["v1"])
    h = block(h, raw["w2"], raw["b2"], raw["g2"], raw["be2"], raw["m2"], raw["v2"])
    h = block(h, raw["w3"], raw["b3"], raw["g3"], raw["be3"], raw["m3"], raw["v3"])
    B, L3, C3 = h.shape
    flat = jnp.transpose(h, (0, 2, 1)).reshape(B, C3 * L3)   # torch x.view(B, -1)
    z = jnp.dot(flat, raw["wl1_xw"], precision=hi) + raw["bl1"]
    z = jnp.maximum(bn(z, raw["gl1"], raw["bel1"], raw["ml1"], raw["vl1"]), 0.0)
    z = jnp.dot(z, raw["wl2"], precision=hi) + raw["bl2"]
    z = jnp.maximum(bn(z, raw["gl2"], raw["bel2"], raw["ml2"], raw["vl2"]), 0.0)
    logits = jnp.dot(z, raw["wl3"], precision=hi) + raw["bl3"]
    return jax.nn.softmax(logits, axis=1)


# ----------------------------------------------------------------------------
# Demo
# ----------------------------------------------------------------------------
if __name__ == "__main__":
    B, Cin, L = 2, 5, 64
    L3 = after_cnn_len(L)            # data_len_after_cnn = 6
    C1, C2, C3 = 32, 64, 128
    Dflat = C3 * L3

    key = jax.random.PRNGKey(0)
    ks = iter(jax.random.split(key, 64))

    def rnd(shape, s=0.1):
        return jax.random.normal(next(ks), shape, jnp.float32) * s

    # Input (PyTorch NCL layout).
    x = rnd((B, Cin, L), 1.0)

    # Conv weights: torch (Cout, Cin, K) stored here pre-transposed as (K, Cin, Cout).
    w1, b1, g1, be1 = rnd((K, Cin, C1)), rnd((C1,)), 1.0 + rnd((C1,)), rnd((C1,))
    w2, b2, g2, be2 = rnd((K, C1, C2)), rnd((C2,)), 1.0 + rnd((C2,)), rnd((C2,))
    w3, b3, g3, be3 = rnd((K, C2, C3)), rnd((C3,)), 1.0 + rnd((C3,)), rnd((C3,))

    # Linear weights: torch (Dout, Din) applied as x @ W.T -> stored as (Din, Dout).
    wl1_xw, bl1, gl1, bel1 = rnd((Dflat, 512)), rnd((512,)), 1.0 + rnd((512,)), rnd((512,))
    wl2, bl2, gl2, bel2 = rnd((512, 512)), rnd((512,)), 1.0 + rnd((512,)), rnd((512,))
    wl3, bl3 = rnd((512, 5)), rnd((5,))

    # Non-trivial eval-mode running statistics (exercises the folding path).
    def running_stats(n):
        return rnd((n,), 0.05), 1.0 + jnp.abs(rnd((n,), 0.2))

    m1, v1 = running_stats(C1)
    m2, v2 = running_stats(C2)
    m3, v3 = running_stats(C3)
    ml1, vl1 = running_stats(512)
    ml2, vl2 = running_stats(512)

    s1, t1 = fold_bn(g1, be1, m1, v1, b1)
    s2, t2 = fold_bn(g2, be2, m2, v2, b2)
    s3, t3 = fold_bn(g3, be3, m3, v3, b3)
    sl1, tl1 = fold_bn(gl1, bel1, ml1, vl1, bl1)
    sl2, tl2 = fold_bn(gl2, bel2, ml2, vl2, bl2)

    params = dict(
        w1=fold_conv_weight(w1), s1=s1, t1=t1,
        w2=fold_conv_weight(w2), s2=s2, t2=t2,
        w3=fold_conv_weight(w3), s3=s3, t3=t3,
        wl1=fold_flatten_into_wl1(wl1_xw, C3, L3), sl1=sl1, tl1=tl1,
        wl2=wl2.astype(jnp.bfloat16), sl2=sl2, tl2=tl2,
        wl3=wl3.astype(jnp.bfloat16), bl3=bl3[None, :],
    )

    out = jax.block_until_ready(gating5_forward(x, params))

    assert out.shape == (B, 5), out.shape
    assert bool(jnp.all(jnp.isfinite(out)))
    row_sums = jnp.sum(out, axis=1)
    assert bool(jnp.all(jnp.abs(row_sums - 1.0) < 1e-4)), row_sums

    # Cross-check against a pure-XLA reference with UN-folded eval-mode BN and
    # PyTorch's NCL flatten (validates BN/bias folding and the wl1 permutation).
    raw = dict(w1=w1, b1=b1, g1=g1, be1=be1, m1=m1, v1=v1,
               w2=w2, b2=b2, g2=g2, be2=be2, m2=m2, v2=v2,
               w3=w3, b3=b3, g3=g3, be3=be3, m3=m3, v3=v3,
               wl1_xw=wl1_xw, bl1=bl1, gl1=gl1, bel1=bel1, ml1=ml1, vl1=vl1,
               wl2=wl2, bl2=bl2, gl2=gl2, bel2=bel2, ml2=ml2, vl2=vl2,
               wl3=wl3, bl3=bl3[None, :])
    ref = jax.block_until_ready(gating5_reference(x, raw))
    # Tolerance loosened (5e-2) because the MLP head runs in bf16 on the kernel
    # side; structural errors (wrong permutation / folding) would be O(0.3+).
    max_err = float(jnp.max(jnp.abs(out - ref)))
    assert max_err < 5e-2, max_err

    print("KERNEL_OK")
</pallas_src>

<mosaic_0001>
module attributes {stable_mosaic.version = 11 : i64} {
  func.func @gating5_fused_kernel(%arg0: memref<128x5xf32, #tpu.memory_space<vmem>>, %arg1: memref<15x32xf32, #tpu.memory_space<vmem>>, %arg2: memref<1x32xf32, #tpu.memory_space<vmem>>, %arg3: memref<1x32xf32, #tpu.memory_space<vmem>>, %arg4: memref<96x64xf32, #tpu.memory_space<vmem>>, %arg5: memref<1x64xf32, #tpu.memory_space<vmem>>, %arg6: memref<1x64xf32, #tpu.memory_space<vmem>>, %arg7: memref<192x128xf32, #tpu.memory_space<vmem>>, %arg8: memref<1x128xf32, #tpu.memory_space<vmem>>, %arg9: memref<1x128xf32, #tpu.memory_space<vmem>>, %arg10: memref<768x512xbf16, #tpu.memory_space<any>>, %arg11: memref<1x512xf32, #tpu.memory_space<vmem>>, %arg12: memref<1x512xf32, #tpu.memory_space<vmem>>, %arg13: memref<512x512xbf16, #tpu.memory_space<any>>, %arg14: memref<1x512xf32, #tpu.memory_space<vmem>>, %arg15: memref<1x512xf32, #tpu.memory_space<vmem>>, %arg16: memref<512x5xbf16, #tpu.memory_space<vmem>>, %arg17: memref<1x5xf32, #tpu.memory_space<vmem>>, %arg18: memref<2x5xf32, #tpu.memory_space<vmem>>, %arg19: memref<2x768xf32, #tpu.memory_space<vmem>>, %arg20: memref<768x512xbf16, #tpu.memory_space<vmem>>, %arg21: memref<512x512xbf16, #tpu.memory_space<vmem>>, %arg22: memref<128x32xf32, #tpu.memory_space<vmem>>, %arg23: memref<64x64xf32, #tpu.memory_space<vmem>>, %arg24: memref<32x128xf32, #tpu.memory_space<vmem>>, %arg25: memref<2x!tpu.dma_semaphore, #tpu.memory_space<semaphore_mem>>) attributes {dimension_semantics = [], scalar_prefetch = 0 : i64, scratch_operands = 7 : i64, tpu.core_type = #tpu.core_type<tc>} {
    %c0_i32 = arith.constant 0 : i32
    %0 = tpu.memref_slice %arg25[%c0_i32] : memref<2x!tpu.dma_semaphore, #tpu.memory_space<semaphore_mem>> -> memref<1x!tpu.dma_semaphore, #tpu.memory_space<semaphore_mem>>
    %1 = tpu.memref_squeeze %0 : memref<1x!tpu.dma_semaphore, #tpu.memory_space<semaphore_mem>> -> memref<!tpu.dma_semaphore, #tpu.memory_space<semaphore_mem>>
    tpu.enqueue_dma source(%arg10 : memref<768x512xbf16, #tpu.memory_space<any>>) target(%arg20 : memref<768x512xbf16, #tpu.memory_space<vmem>>) target_semaphore(%1 : memref<!tpu.dma_semaphore, #tpu.memory_space<semaphore_mem>>)
    %c1_i32 = arith.constant 1 : i32
    %2 = tpu.memref_slice %arg25[%c1_i32] : memref<2x!tpu.dma_semaphore, #tpu.memory_space<semaphore_mem>> -> memref<1x!tpu.dma_semaphore, #tpu.memory_space<semaphore_mem>>
    %3 = tpu.memref_squeeze %2 : memref<1x!tpu.dma_semaphore, #tpu.memory_space<semaphore_mem>> -> memref<!tpu.dma_semaphore, #tpu.memory_space<semaphore_mem>>
    tpu.enqueue_dma source(%arg13 : memref<512x512xbf16, #tpu.memory_space<any>>) target(%arg21 : memref<512x512xbf16, #tpu.memory_space<vmem>>) target_semaphore(%3 : memref<!tpu.dma_semaphore, #tpu.memory_space<semaphore_mem>>)
    %c0 = arith.constant 0 : index
    %c0_0 = arith.constant 0 : index
    %4 = vector.load %arg0[%c0, %c0_0] : memref<128x5xf32, #tpu.memory_space<vmem>>, vector<128x5xf32>
    %c0_1 = arith.constant 0 : index
    %c0_2 = arith.constant 0 : index
    %5 = vector.load %arg2[%c0_1, %c0_2] : memref<1x32xf32, #tpu.memory_space<vmem>>, vector<1x32xf32>
    %c0_3 = arith.constant 0 : index
    %c0_4 = arith.constant 0 : index
    %6 = vector.load %arg3[%c0_3, %c0_4] : memref<1x32xf32, #tpu.memory_space<vmem>>, vector<1x32xf32>
    %c127_i32 = arith.constant 127 : i32
    %7 = tpu.dynamic_rotate %4 by %c127_i32 dim 0 : vector<128x5xf32>, i32 -> vector<128x5xf32>
    %c126_i32 = arith.constant 126 : i32
    %8 = tpu.dynamic_rotate %4 by %c126_i32 dim 0 : vector<128x5xf32>, i32 -> vector<128x5xf32>
    %9 = tpu.concatenate %4, %7, %8 in 1 : vector<128x5xf32>, vector<128x5xf32>, vector<128x5xf32> -> vector<128x15xf32>
    %c0_5 = arith.constant 0 : index
    %c0_6 = arith.constant 0 : index
    %10 = vector.load %arg1[%c0_5, %c0_6] : memref<15x32xf32, #tpu.memory_space<vmem>>, vector<15x32xf32>
    %cst = arith.constant dense<0.000000e+00> : vector<128x32xf32>
    %11 = tpu.matmul %9, %10, %cst {dimension_numbers = #tpu.dot_dimension_numbers<[1], [0], [0], [1], [0, 0, 1, 1], [], []>} : vector<128x15xf32>, vector<15x32xf32>, vector<128x32xf32> -> vector<128x32xf32>
    %12 = vector.broadcast %5 : vector<1x32xf32> to vector<128x32xf32>
    %13 = arith.mulf %11, %12 : vector<128x32xf32>
    %14 = vector.broadcast %6 : vector<1x32xf32> to vector<128x32xf32>
    %15 = arith.addf %13, %14 : vector<128x32xf32>
    %cst_7 = arith.constant 0.000000e+00 : f32
    %16 = vector.broadcast %cst_7 : f32 to vector<128x32xf32>
    %17 = arith.maximumf %15, %16 : vector<128x32xf32>
    %c0_8 = arith.constant 0 : index
    %c0_9 = arith.constant 0 : index
    %18 = vector.load %arg22[%c0_8, %c0_9] : memref<128x32xf32, #tpu.memory_space<vmem>>, vector<128x32xf32>
    tpu.vector_store %arg22[%c0_8, %c0_9], %17 {strides = array<i32>} : memref<128x32xf32, #tpu.memory_space<vmem>>, vector<128x32xf32>,
    %c0_10 = arith.constant 0 : index
    %c0_11 = arith.constant 0 : index
    %19 = tpu.strided_load %arg22[%c0_10, %c0_11] {strides = array<i32: 2, 1>} : memref<128x32xf32, #tpu.memory_space<vmem>>, vector<64x32xf32>
    %c1 = arith.constant 1 : index
    %c0_12 = arith.constant 0 : index
    %20 = tpu.strided_load %arg22[%c1, %c0_12] {strides = array<i32: 2, 1>} : memref<128x32xf32, #tpu.memory_space<vmem>>, vector<64x32xf32>
    %21 = arith.maximumf %19, %20 : vector<64x32xf32>
    %c0_13 = arith.constant 0 : index
    %c0_14 = arith.constant 0 : index
    %22 = vector.load %arg5[%c0_13, %c0_14] : memref<1x64xf32, #tpu.memory_space<vmem>>, vector<1x64xf32>
    %c0_15 = arith.constant 0 : index
    %c0_16 = arith.constant 0 : index
    %23 = vector.load %arg6[%c0_15, %c0_16] : memref<1x64xf32, #tpu.memory_space<vmem>>, vector<1x64xf32>
    %c63_i32 = arith.constant 63 : i32
    %24 = tpu.dynamic_rotate %21 by %c63_i32 dim 0 : vector<64x32xf32>, i32 -> vector<64x32xf32>
    %c62_i32 = arith.constant 62 : i32
    %25 = tpu.dynamic_rotate %21 by %c62_i32 dim 0 : vector<64x32xf32>, i32 -> vector<64x32xf32>
    %26 = tpu.concatenate %21, %24, %25 in 1 : vector<64x32xf32>, vector<64x32xf32>, vector<64x32xf32> -> vector<64x96xf32>
    %c0_17 = arith.constant 0 : index
    %c0_18 = arith.constant 0 : index
    %27 = vector.load %arg4[%c0_17, %c0_18] : memref<96x64xf32, #tpu.memory_space<vmem>>, vector<96x64xf32>
    %cst_19 = arith.constant dense<0.000000e+00> : vector<64x64xf32>
    %28 = tpu.matmul %26, %27, %cst_19 {dimension_numbers = #tpu.dot_dimension_numbers<[1], [0], [0], [1], [0, 0, 1, 1], [], []>} : vector<64x96xf32>, vector<96x64xf32>, vector<64x64xf32> -> vector<64x64xf32>
    %29 = vector.broadcast %22 : vector<1x64xf32> to vector<64x64xf32>
    %30 = arith.mulf %28, %29 : vector<64x64xf32>
    %31 = vector.broadcast %23 : vector<1x64xf32> to vector<64x64xf32>
    %32 = arith.addf %30, %31 : vector<64x64xf32>
    %cst_20 = arith.constant 0.000000e+00 : f32
    %33 = vector.broadcast %cst_20 : f32 to vector<64x64xf32>
    %34 = arith.maximumf %32, %33 : vector<64x64xf32>
    %c0_21 = arith.constant 0 : index
    %c0_22 = arith.constant 0 : index
    %35 = vector.load %arg23[%c0_21, %c0_22] : memref<64x64xf32, #tpu.memory_space<vmem>>, vector<64x64xf32>
    tpu.vector_store %arg23[%c0_21, %c0_22], %34 {strides = array<i32>} : memref<64x64xf32, #tpu.memory_space<vmem>>, vector<64x64xf32>,
    %c0_23 = arith.constant 0 : index
    %c0_24 = arith.constant 0 : index
    %36 = tpu.strided_load %arg23[%c0_23, %c0_24] {strides = array<i32: 2, 1>} : memref<64x64xf32, #tpu.memory_space<vmem>>, vector<32x64xf32>
    %c1_25 = arith.constant 1 : index
    %c0_26 = arith.constant 0 : index
    %37 = tpu.strided_load %arg23[%c1_25, %c0_26] {strides = array<i32: 2, 1>} : memref<64x64xf32, #tpu.memory_space<vmem>>, vector<32x64xf32>
    %38 = arith.maximumf %36, %37 : vector<32x64xf32>
    %c0_27 = arith.constant 0 : index
    %c0_28 = arith.constant 0 : index
    %39 = vector.load %arg8[%c0_27, %c0_28] : memref<1x128xf32, #tpu.memory_space<vmem>>, vector<1x128xf32>
    %c0_29 = arith.constant 0 : index
    %c0_30 = arith.constant 0 : index
    %40 = vector.load %arg9[%c0_29, %c0_30] : memref<1x128xf32, #tpu.memory_space<vmem>>, vector<1x128xf32>
    %c31_i32 = arith.constant 31 : i32
    %41 = tpu.dynamic_rotate %38 by %c31_i32 dim 0 : vector<32x64xf32>, i32 -> vector<32x64xf32>
    %c30_i32 = arith.constant 30 : i32
    %42 = tpu.dynamic_rotate %38 by %c30_i32 dim 0 : vector<32x64xf32>, i32 -> vector<32x64xf32>
    %43 = tpu.concatenate %38, %41, %42 in 1 : vector<32x64xf32>, vector<32x64xf32>, vector<32x64xf32> -> vector<32x192xf32>
    %c0_31 = arith.constant 0 : index
    %c0_32 = arith.constant 0 : index
    %44 = vector.load %arg7[%c0_31, %c0_32] : memref<192x128xf32, #tpu.memory_space<vmem>>, vector<192x128xf32>
    %cst_33 = arith.constant dense<0.000000e+00> : vector<32x128xf32>
    %45 = tpu.matmul %43, %44, %cst_33 {dimension_numbers = #tpu.dot_dimension_numbers<[1], [0], [0], [1], [0, 0, 1, 1], [], []>} : vector<32x192xf32>, vector<192x128xf32>, vector<32x128xf32> -> vector<32x128xf32>
    %46 = vector.broadcast %39 : vector<1x128xf32> to vector<32x128xf32>
    %47 = arith.mulf %45, %46 : vector<32x128xf32>
    %48 = vector.broadcast %40 : vector<1x128xf32> to vector<32x128xf32>
    %49 = arith.addf %47, %48 : vector<32x128xf32>
    %cst_34 = arith.constant 0.000000e+00 : f32
    %50 = vector.broadcast %cst_34 : f32 to vector<32x128xf32>
    %51 = arith.maximumf %49, %50 : vector<32x128xf32>
    %c0_35 = arith.constant 0 : index
    %c0_36 = arith.constant 0 : index
    %52 = vector.load %arg24[%c0_35, %c0_36] : memref<32x128xf32, #tpu.memory_space<vmem>>, vector<32x128xf32>
    tpu.vector_store %arg24[%c0_35, %c0_36], %51 {strides = array<i32>} : memref<32x128xf32, #tpu.memory_space<vmem>>, vector<32x128xf32>,
    %c0_37 = arith.constant 0 : index
    %c0_38 = arith.constant 0 : index
    %53 = tpu.strided_load %arg24[%c0_37, %c0_38] {strides = array<i32: 2, 1>} : memref<32x128xf32, #tpu.memory_space<vmem>>, vector<16x128xf32>
    %c1_39 = arith.constant 1 : index
    %c0_40 = arith.constant 0 : index
    %54 = tpu.strided_load %arg24[%c1_39, %c0_40] {strides = array<i32: 2, 1>} : memref<32x128xf32, #tpu.memory_space<vmem>>, vector<16x128xf32>
    %55 = arith.maximumf %53, %54 : vector<16x128xf32>
    %56 = vector.extract_strided_slice %55 {offsets = [0, 0], sizes = [1, 128], strides = [1, 1]} : vector<16x128xf32> to vector<1x128xf32>
    %c0_41 = arith.constant 0 : index
    %c0_42 = arith.constant 0 : index
    %57 = vector.load %arg19[%c0_41, %c0_42] : memref<2x768xf32, #tpu.memory_space<vmem>>, vector<1x128xf32>
    tpu.vector_store %arg19[%c0_41, %c0_42], %56 {strides = array<i32>} : memref<2x768xf32, #tpu.memory_space<vmem>>, vector<1x128xf32>,
    %58 = vector.extract_strided_slice %55 {offsets = [1, 0], sizes = [1, 128], strides = [1, 1]} : vector<16x128xf32> to vector<1x128xf32>
    %c0_43 = arith.constant 0 : index
    %c128 = arith.constant 128 : index
    %59 = vector.load %arg19[%c0_43, %c128] : memref<2x768xf32, #tpu.memory_space<vmem>>, vector<1x128xf32>
    tpu.vector_store %arg19[%c0_43, %c128], %58 {strides = array<i32>} : memref<2x768xf32, #tpu.memory_space<vmem>>, vector<1x128xf32>,
    %60 = vector.extract_strided_slice %55 {offsets = [2, 0], sizes = [1, 128], strides = [1, 1]} : vector<16x128xf32> to vector<1x128xf32>
    %c0_44 = arith.constant 0 : index
    %c256 = arith.constant 256 : index
    %61 = vector.load %arg19[%c0_44, %c256] : memref<2x768xf32, #tpu.memory_space<vmem>>, vector<1x128xf32>
    tpu.vector_store %arg19[%c0_44, %c256], %60 {strides = array<i32>} : memref<2x768xf32, #tpu.memory_space<vmem>>, vector<1x128xf32>,
    %62 = vector.extract_strided_slice %55 {offsets = [3, 0], sizes = [1, 128], strides = [1, 1]} : vector<16x128xf32> to vector<1x128xf32>
    %c0_45 = arith.constant 0 : index
    %c384 = arith.constant 384 : index
    %63 = vector.load %arg19[%c0_45, %c384] : memref<2x768xf32, #tpu.memory_space<vmem>>, vector<1x128xf32>
    tpu.vector_store %arg19[%c0_45, %c384], %62 {strides = array<i32>} : memref<2x768xf32, #tpu.memory_space<vmem>>, vector<1x128xf32>,
    %64 = vector.extract_strided_slice %55 {offsets = [4, 0], sizes = [1, 128], strides = [1, 1]} : vector<16x128xf32> to vector<1x128xf32>
    %c0_46 = arith.constant 0 : index
    %c512 = arith.constant 512 : index
    %65 = vector.load %arg19[%c0_46, %c512] : memref<2x768xf32, #tpu.memory_space<vmem>>, vector<1x128xf32>
    tpu.vector_store %arg19[%c0_46, %c512], %64 {strides = array<i32>} : memref<2x768xf32, #tpu.memory_space<vmem>>, vector<1x128xf32>,
    %66 = vector.extract_strided_slice %55 {offsets = [5, 0], sizes = [1, 128], strides = [1, 1]} : vector<16x128xf32> to vector<1x128xf32>
    %c0_47 = arith.constant 0 : index
    %c640 = arith.constant 640 : index
    %67 = vector.load %arg19[%c0_47, %c640] : memref<2x768xf32, #tpu.memory_space<vmem>>, vector<1x128xf32>
    tpu.vector_store %arg19[%c0_47, %c640], %66 {strides = array<i32>} : memref<2x768xf32, #tpu.memory_space<vmem>>, vector<1x128xf32>,
    %68 = vector.extract_strided_slice %55 {offsets = [8, 0], sizes = [1, 128], strides = [1, 1]} : vector<16x128xf32> to vector<1x128xf32>
    %c1_48 = arith.constant 1 : index
    %c0_49 = arith.constant 0 : index
    %69 = vector.load %arg19[%c1_48, %c0_49] : memref<2x768xf32, #tpu.memory_space<vmem>>, vector<1x128xf32>
    tpu.vector_store %arg19[%c1_48, %c0_49], %68 {strides = array<i32>} : memref<2x768xf32, #tpu.memory_space<vmem>>, vector<1x128xf32>,
    %70 = vector.extract_strided_slice %55 {offsets = [9, 0], sizes = [1, 128], strides = [1, 1]} : vector<16x128xf32> to vector<1x128xf32>
    %c1_50 = arith.constant 1 : index
    %c128_51 = arith.constant 128 : index
    %71 = vector.load %arg19[%c1_50, %c128_51] : memref<2x768xf32, #tpu.memory_space<vmem>>, vector<1x128xf32>
    tpu.vector_store %arg19[%c1_50, %c128_51], %70 {strides = array<i32>} : memref<2x768xf32, #tpu.memory_space<vmem>>, vector<1x128xf32>,
    %72 = vector.extract_strided_slice %55 {offsets = [10, 0], sizes = [1, 128], strides = [1, 1]} : vector<16x128xf32> to vector<1x128xf32>
    %c1_52 = arith.constant 1 : index
    %c256_53 = arith.constant 256 : index
    %73 = vector.load %arg19[%c1_52, %c256_53] : memref<2x768xf32, #tpu.memory_space<vmem>>, vector<1x128xf32>
    tpu.vector_store %arg19[%c1_52, %c256_53], %72 {strides = array<i32>} : memref<2x768xf32, #tpu.memory_space<vmem>>, vector<1x128xf32>,
    %74 = vector.extract_strided_slice %55 {offsets = [11, 0], sizes = [1, 128], strides = [1, 1]} : vector<16x128xf32> to vector<1x128xf32>
    %c1_54 = arith.constant 1 : index
    %c384_55 = arith.constant 384 : index
    %75 = vector.load %arg19[%c1_54, %c384_55] : memref<2x768xf32, #tpu.memory_space<vmem>>, vector<1x128xf32>
    tpu.vector_store %arg19[%c1_54, %c384_55], %74 {strides = array<i32>} : memref<2x768xf32, #tpu.memory_space<vmem>>, vector<1x128xf32>,
    %76 = vector.extract_strided_slice %55 {offsets = [12, 0], sizes = [1, 128], strides = [1, 1]} : vector<16x128xf32> to vector<1x128xf32>
    %c1_56 = arith.constant 1 : index
    %c512_57 = arith.constant 512 : index
    %77 = vector.load %arg19[%c1_56, %c512_57] : memref<2x768xf32, #tpu.memory_space<vmem>>, vector<1x128xf32>
    tpu.vector_store %arg19[%c1_56, %c512_57], %76 {strides = array<i32>} : memref<2x768xf32, #tpu.memory_space<vmem>>, vector<1x128xf32>,
    %78 = vector.extract_strided_slice %55 {offsets = [13, 0], sizes = [1, 128], strides = [1, 1]} : vector<16x128xf32> to vector<1x128xf32>
    %c1_58 = arith.constant 1 : index
    %c640_59 = arith.constant 640 : index
    %79 = vector.load %arg19[%c1_58, %c640_59] : memref<2x768xf32, #tpu.memory_space<vmem>>, vector<1x128xf32>
    tpu.vector_store %arg19[%c1_58, %c640_59], %78 {strides = array<i32>} : memref<2x768xf32, #tpu.memory_space<vmem>>, vector<1x128xf32>,
    %c0_i32_60 = arith.constant 0 : i32
    %80 = tpu.memref_slice %arg25[%c0_i32_60] : memref<2x!tpu.dma_semaphore, #tpu.memory_space<semaphore_mem>> -> memref<1x!tpu.dma_semaphore, #tpu.memory_space<semaphore_mem>>
    %81 = tpu.memref_squeeze %80 : memref<1x!tpu.dma_semaphore, #tpu.memory_space<semaphore_mem>> -> memref<!tpu.dma_semaphore, #tpu.memory_space<semaphore_mem>>
    tpu.wait_dma2 semaphore(%81 : memref<!tpu.dma_semaphore, #tpu.memory_space<semaphore_mem>>) src(%arg10 : memref<768x512xbf16, #tpu.memory_space<any>>) dst(%arg20 : memref<768x512xbf16, #tpu.memory_space<vmem>>)
    %c0_61 = arith.constant 0 : index
    %c0_62 = arith.constant 0 : index
    %82 = vector.load %arg19[%c0_61, %c0_62] : memref<2x768xf32, #tpu.memory_space<vmem>>, vector<2x768xf32>
    %83 = arith.truncf %82 : vector<2x768xf32> to vector<2x768xbf16>
    %c0_63 = arith.constant 0 : index
    %c0_64 = arith.constant 0 : index
    %84 = vector.load %arg20[%c0_63, %c0_64] : memref<768x512xbf16, #tpu.memory_space<vmem>>, vector<768x512xbf16>
    %cst_65 = arith.constant dense<0.000000e+00> : vector<2x512xf32>
    %85 = tpu.matmul %83, %84, %cst_65 {dimension_numbers = #tpu.dot_dimension_numbers<[1], [0], [0], [1], [0, 0, 1, 1], [], []>} : vector<2x768xbf16>, vector<768x512xbf16>, vector<2x512xf32> -> vector<2x512xf32>
    %c0_66 = arith.constant 0 : index
    %c0_67 = arith.constant 0 : index
    %86 = vector.load %arg11[%c0_66, %c0_67] : memref<1x512xf32, #tpu.memory_space<vmem>>, vector<1x512xf32>
    %87 = vector.broadcast %86 : vector<1x512xf32> to vector<2x512xf32>
    %88 = arith.mulf %85, %87 : vector<2x512xf32>
    %c0_68 = arith.constant 0 : index
    %c0_69 = arith.constant 0 : index
    %89 = vector.load %arg12[%c0_68, %c0_69] : memref<1x512xf32, #tpu.memory_space<vmem>>, vector<1x512xf32>
    %90 = vector.broadcast %89 : vector<1x512xf32> to vector<2x512xf32>
    %91 = arith.addf %88, %90 : vector<2x512xf32>
    %cst_70 = arith.constant 0.000000e+00 : f32
    %92 = vector.broadcast %cst_70 : f32 to vector<2x512xf32>
    %93 = arith.maximumf %91, %92 : vector<2x512xf32>
    %c1_i32_71 = arith.constant 1 : i32
    %94 = tpu.memref_slice %arg25[%c1_i32_71] : memref<2x!tpu.dma_semaphore, #tpu.memory_space<semaphore_mem>> -> memref<1x!tpu.dma_semaphore, #tpu.memory_space<semaphore_mem>>
    %95 = tpu.memref_squeeze %94 : memref<1x!tpu.dma_semaphore, #tpu.memory_space<semaphore_mem>> -> memref<!tpu.dma_semaphore, #tpu.memory_space<semaphore_mem>>
    tpu.wait_dma2 semaphore(%95 : memref<!tpu.dma_semaphore, #tpu.memory_space<semaphore_mem>>) src(%arg13 : memref<512x512xbf16, #tpu.memory_space<any>>) dst(%arg21 : memref<512x512xbf16, #tpu.memory_space<vmem>>)
    %96 = arith.truncf %93 : vector<2x512xf32> to vector<2x512xbf16>
    %c0_72 = arith.constant 0 : index
    %c0_73 = arith.constant 0 : index
    %97 = vector.load %arg21[%c0_72, %c0_73] : memref<512x512xbf16, #tpu.memory_space<vmem>>, vector<512x512xbf16>
    %cst_74 = arith.constant dense<0.000000e+00> : vector<2x512xf32>
    %98 = tpu.matmul %96, %97, %cst_74 {dimension_numbers = #tpu.dot_dimension_numbers<[1], [0], [0], [1], [0, 0, 1, 1], [], []>} : vector<2x512xbf16>, vector<512x512xbf16>, vector<2x512xf32> -> vector<2x512xf32>
    %c0_75 = arith.constant 0 : index
    %c0_76 = arith.constant 0 : index
    %99 = vector.load %arg14[%c0_75, %c0_76] : memref<1x512xf32, #tpu.memory_space<vmem>>, vector<1x512xf32>
    %100 = vector.broadcast %99 : vector<1x512xf32> to vector<2x512xf32>
    %101 = arith.mulf %98, %100 : vector<2x512xf32>
    %c0_77 = arith.constant 0 : index
    %c0_78 = arith.constant 0 : index
    %102 = vector.load %arg15[%c0_77, %c0_78] : memref<1x512xf32, #tpu.memory_space<vmem>>, vector<1x512xf32>
    %103 = vector.broadcast %102 : vector<1x512xf32> to vector<2x512xf32>
    %104 = arith.addf %101, %103 : vector<2x512xf32>
    %cst_79 = arith.constant 0.000000e+00 : f32
    %105 = vector.broadcast %cst_79 : f32 to vector<2x512xf32>
    %106 = arith.maximumf %104, %105 : vector<2x512xf32>
    %107 = arith.truncf %106 : vector<2x512xf32> to vector<2x512xbf16>
    %c0_80 = arith.constant 0 : index
    %c0_81 = arith.constant 0 : index
    %108 = vector.load %arg16[%c0_80, %c0_81] : memref<512x5xbf16, #tpu.memory_space<vmem>>, vector<512x5xbf16>
    %cst_82 = arith.constant dense<0.000000e+00> : vector<2x5xf32>
    %109 = tpu.matmul %107, %108, %cst_82 {dimension_numbers = #tpu.dot_dimension_numbers<[1], [0], [0], [1], [0, 0, 1, 1], [], []>} : vector<2x512xbf16>, vector<512x5xbf16>, vector<2x5xf32> -> vector<2x5xf32>
    %c0_83 = arith.constant 0 : index
    %c0_84 = arith.constant 0 : index
    %110 = vector.load %arg17[%c0_83, %c0_84] : memref<1x5xf32, #tpu.memory_space<vmem>>, vector<1x5xf32>
    %111 = vector.broadcast %110 : vector<1x5xf32> to vector<2x5xf32>
    %112 = arith.addf %109, %111 : vector<2x5xf32>
    %cst_85 = arith.constant dense<0xFF800000> : vector<2xf32>
    %113 = vector.multi_reduction <maximumf>, %112, %cst_85 [1] : vector<2x5xf32> to vector<2xf32>
    %114 = vector.shape_cast %113 : vector<2xf32> to vector<2x1xf32>
    %115 = vector.broadcast %114 : vector<2x1xf32> to vector<2x5xf32>
    %116 = arith.subf %112, %115 : vector<2x5xf32>
    %117 = math.exp %116 : vector<2x5xf32>
    %cst_86 = arith.constant dense<0.000000e+00> : vector<2xf32>
    %118 = vector.multi_reduction <add>, %117, %cst_86 [1] : vector<2x5xf32> to vector<2xf32>
    %119 = vector.shape_cast %118 : vector<2xf32> to vector<2x1xf32>
    %120 = vector.broadcast %119 : vector<2x1xf32> to vector<2x5xf32>
    %121 = arith.divf %117, %120 : vector<2x5xf32>
    %c0_87 = arith.constant 0 : index
    %c0_88 = arith.constant 0 : index
    %122 = vector.load %arg18[%c0_87, %c0_88] : memref<2x5xf32, #tpu.memory_space<vmem>>, vector<2x5xf32>
    tpu.vector_store %arg18[%c0_87, %c0_88], %121 {strides = array<i32>} : memref<2x5xf32, #tpu.memory_space<vmem>>, vector<2x5xf32>,
    return
  }
}

</mosaic_0001>

<llo_original>
// kernel: tpu_custom_call.1
$region0: #{tpu_custom_call.1}
  #allocation0 [shape = 'u32[]', space=smem, size = 0x4, offset = 0x4, fixed_abs, tag = 'smem constant byte address 0x4 - core index']
  #allocation1 [shape = 'u32[144,128]{1,0:T(1,128)}', space=vmem, size = 0x12000, scoped, tag = 'internal scratch']
  #allocation2 [shape = 'f32[2,768]{1,0:T(2,128)}', space=vmem, size = 0x1800, scoped, tag = 'scratch operand']
  #allocation3 [shape = 'bf16[768,512]{1,0:T(16,128)(2,1)}', space=vmem, size = 0xc0000, scoped, tag = 'scratch operand']
  #allocation4 [shape = 'bf16[512,512]{1,0:T(16,128)(2,1)}', space=vmem, size = 0x80000, scoped, tag = 'scratch operand']
  #allocation5 [shape = 'f32[128,32]{1,0:T(8,128)}', space=vmem, size = 0x10000, scoped, tag = 'scratch operand']
  #allocation6 [shape = 'f32[64,64]{1,0:T(8,128)}', space=vmem, size = 0x8000, scoped, tag = 'scratch operand']
  #allocation7 [shape = 'f32[32,128]{1,0:T(8,128)}', space=vmem, size = 0x4000, scoped, tag = 'scratch operand']
  #allocation8 [shape = 's32[2]{0}', space=sflag, size = 0x8, scoped, tag = 'scratch operand']
  #allocation11 [shape = 's32[]', space=sflag, size = 0x4, offset = 0, fixed_abs, tag = 'sflag constant byte address 0x0 - dummy sync flag']
  #allocation13 [shape = 's32[]', space=sflag, size = 0x4, offset = 0, fixed_abs, tag = 'sflag constant byte address 0x0 - dummy sync flag']
  %s0 = inlined_call_operand.vmem [shape: f32[128,5], index: 0, kind: input, shape index: {}]
  %s1 = inlined_call_operand.vmem [shape: f32[15,32], index: 1, kind: input, shape index: {}]
  %s2 = inlined_call_operand.vmem [shape: f32[1,32], index: 2, kind: input, shape index: {}]
  %s3 = inlined_call_operand.vmem [shape: f32[1,32], index: 3, kind: input, shape index: {}]
  %s4 = inlined_call_operand.vmem [shape: f32[96,64], index: 4, kind: input, shape index: {}]
  %s5 = inlined_call_operand.vmem [shape: f32[1,64], index: 5, kind: input, shape index: {}]
  %s6 = inlined_call_operand.vmem [shape: f32[1,64], index: 6, kind: input, shape index: {}]
  %s7 = inlined_call_operand.vmem [shape: f32[192,128], index: 7, kind: input, shape index: {}]
  %s8 = inlined_call_operand.vmem [shape: f32[1,128], index: 8, kind: input, shape index: {}]
  %s9 = inlined_call_operand.vmem [shape: f32[1,128], index: 9, kind: input, shape index: {}]
  %s10 = inlined_call_operand.hbm [shape: bf16[768,512], index: 10, kind: input, shape index: {}]
  %s11 = inlined_call_operand.vmem [shape: f32[1,512], index: 11, kind: input, shape index: {}]
  %s12 = inlined_call_operand.vmem [shape: f32[1,512], index: 12, kind: input, shape index: {}]
  %s13 = inlined_call_operand.hbm [shape: bf16[512,512], index: 13, kind: input, shape index: {}]
  %s14 = inlined_call_operand.vmem [shape: f32[1,512], index: 14, kind: input, shape index: {}]
  %s15 = inlined_call_operand.vmem [shape: f32[1,512], index: 15, kind: input, shape index: {}]
  %s16 = inlined_call_operand.vmem [shape: bf16[512,5], index: 16, kind: input, shape index: {}]
  %s17 = inlined_call_operand.vmem [shape: f32[1,5], index: 17, kind: input, shape index: {}]
  %s18 = inlined_call_operand.hbm [shape: f32[2,5], index: 18, kind: output, shape index: {}]
  %s19 = sld [smem:[#allocation0]]
  $region74: #{tpu_custom_call.1} parent=0
    _
  %s21 = ssub.s32 1, %s19
  %s22 = scalar_select 0, %s21, %s19
  $region1: #{tpu_custom_call.1} parent=0
    #allocation9 [shape = 'u8[1024]{0}', space=vmem, size = 0x400, scoped, tag = 'output window, operand 0, single buffered']
    #allocation10 [shape = 's32[1]{0}', space=sflag, size = 0x4, scoped, tag = 'scoped memory for tpu_custom_call.1']
    #allocation12 [shape = 'u32[9]{0}', space=smem, size = 0x24, scoped, tag = 'DMA stride descriptor']
    #allocation14 [shape = 'u32[9]{0}', space=smem, size = 0x24, scoped, tag = 'DMA stride descriptor']
    %23 = vsyncpa [#allocation10], 0
    // Predicated region
    $region2: #{tpu_custom_call.1} parent=1 // pred_check
      _
    $region3: #{tpu_custom_call.1} parent=1 // pred_check_branch
      %25 = sbr.rel (0) target = $region5
    $region4: #{tpu_custom_call.1} parent=1 // pred_region
      _
    $region5: #{tpu_custom_call.1} parent=1 // pred_fallthru
      _
    // Predicated region
    $region6: #{tpu_custom_call.1} parent=1 // pred_check
      _
    $region7: #{tpu_custom_call.1} parent=1 // pred_check_branch
      %27 = sbr.rel (0) target = $region9
    $region8: #{tpu_custom_call.1} parent=1 // pred_region
      _
    $region9: #{tpu_custom_call.1} parent=1 // pred_fallthru
      _
    // Predicated region
    $region10: #{tpu_custom_call.1} parent=1 // pred_check
      _
    $region11: #{tpu_custom_call.1} parent=1 // pred_check_branch
      %29 = sbr.rel (0) target = $region13
    $region12: #{tpu_custom_call.1} parent=1 // pred_region
      _
    $region13: #{tpu_custom_call.1} parent=1 // pred_fallthru
      _
    // Predicated region
    $region14: #{tpu_custom_call.1} parent=1 // pred_check
      _
    $region15: #{tpu_custom_call.1} parent=1 // pred_check_branch
      %31 = sbr.rel (0) target = $region17
    $region16: #{tpu_custom_call.1} parent=1 // pred_region
      _
    $region17: #{tpu_custom_call.1} parent=1 // pred_fallthru
      _
    // Predicated region
    $region18: #{tpu_custom_call.1} parent=1 // pred_check
      _
    $region19: #{tpu_custom_call.1} parent=1 // pred_check_branch
      %33 = sbr.rel (0) target = $region21
    $region20: #{tpu_custom_call.1} parent=1 // pred_region
      _
    $region21: #{tpu_custom_call.1} parent=1 // pred_fallthru
      _
    // Predicated region
    $region22: #{tpu_custom_call.1} parent=1 // pred_check
      _
    $region23: #{tpu_custom_call.1} parent=1 // pred_check_branch
      %35 = sbr.rel (0) target = $region25
    $region24: #{tpu_custom_call.1} parent=1 // pred_region
      _
    $region25: #{tpu_custom_call.1} parent=1 // pred_fallthru
      _
    // Predicated region
    $region26: #{tpu_custom_call.1} parent=1 // pred_check
      _
    $region27: #{tpu_custom_call.1} parent=1 // pred_check_branch
      %37 = sbr.rel (0) target = $region29
    $region28: #{tpu_custom_call.1} parent=1 // pred_region
      _
    $region29: #{tpu_custom_call.1} parent=1 // pred_fallthru
      _
    // Predicated region
    $region30: #{tpu_custom_call.1} parent=1 // pred_check
      _
    $region31: #{tpu_custom_call.1} parent=1 // pred_check_branch
      %39 = sbr.rel (0) target = $region33
    $region32: #{tpu_custom_call.1} parent=1 // pred_region
      _
    $region33: #{tpu_custom_call.1} parent=1 // pred_fallthru
      _
    // Predicated region
    $region34: #{tpu_custom_call.1} parent=1 // pred_check
      _
    $region35: #{tpu_custom_call.1} parent=1 // pred_check_branch
      %41 = sbr.rel (0) target = $region37
    $region36: #{tpu_custom_call.1} parent=1 // pred_region
      _
    $region37: #{tpu_custom_call.1} parent=1 // pred_fallthru
      _
    // Predicated region
    $region38: #{tpu_custom_call.1} parent=1 // pred_check
      _
    $region39: #{tpu_custom_call.1} parent=1 // pred_check_branch
      %43 = sbr.rel (0) target = $region41
    $region40: #{tpu_custom_call.1} parent=1 // pred_region
      _
    $region41: #{tpu_custom_call.1} parent=1 // pred_fallthru
      _
    // Predicated region
    $region42: #{tpu_custom_call.1} parent=1 // pred_check
      _
    $region43: #{tpu_custom_call.1} parent=1 // pred_check_branch
      %45 = sbr.rel (0) target = $region45
    $region44: #{tpu_custom_call.1} parent=1 // pred_region
      _
    $region45: #{tpu_custom_call.1} parent=1 // pred_fallthru
      _
    // Predicated region
    $region46: #{tpu_custom_call.1} parent=1 // pred_check
      _
    $region47: #{tpu_custom_call.1} parent=1 // pred_check_branch
      %47 = sbr.rel (0) target = $region49
    $region48: #{tpu_custom_call.1} parent=1 // pred_region
      _
    $region49: #{tpu_custom_call.1} parent=1 // pred_fallthru
      _
    // Predicated region
    $region50: #{tpu_custom_call.1} parent=1 // pred_check
      _
    $region51: #{tpu_custom_call.1} parent=1 // pred_check_branch
      %49 = sbr.rel (0) target = $region53
    $region52: #{tpu_custom_call.1} parent=1 // pred_region
      _
    $region53: #{tpu_custom_call.1} parent=1 // pred_fallthru
      _
    // Predicated region
    $region54: #{tpu_custom_call.1} parent=1 // pred_check
      _
    $region55: #{tpu_custom_call.1} parent=1 // pred_check_branch
      %51 = sbr.rel (0) target = $region57
    $region56: #{tpu_custom_call.1} parent=1 // pred_region
      _
    $region57: #{tpu_custom_call.1} parent=1 // pred_fallthru
      _
    // Predicated region
    $region58: #{tpu_custom_call.1} parent=1 // pred_check
      _
    $region59: #{tpu_custom_call.1} parent=1 // pred_check_branch
      %53 = sbr.rel (0) target = $region61
    $region60: #{tpu_custom_call.1} parent=1 // pred_region
      _
    $region61: #{tpu_custom_call.1} parent=1 // pred_fallthru
      _
    // Predicated region
    $region62: #{tpu_custom_call.1} parent=1 // pred_check
      _
    $region63: #{tpu_custom_call.1} parent=1 // pred_check_branch
      %55 = sbr.rel (0) target = $region65
    $region64: #{tpu_custom_call.1} parent=1 // pred_region
      _
    $region65: #{tpu_custom_call.1} parent=1 // pred_fallthru
      _
    %s58 = sshll.u32 1, 14
    %s59 = sxor.u32 4294967295, %s58
    %s61 = sld [smem:[#allocation0]]
    %s62 = sadd.s32 2, %s61
    %s64 = sshll.u32 7, 26
    %s65 = sxor.u32 4294967295, %s64
    %s66 = sand.u32 0, %s65
    %s67 = sshll.u32 %s62, 26
    %s68 = sor.u32 %s66, %s67
    %s69 = sshll.u32 [#allocation3], 4
    %s70 = int_to_ptr.vmem [resolvable:$true] %s69
    %73 = sst [smem:[#allocation12]] 512
    %s74 = scalar_lea.smem [#allocation12], 1
    %75 = sst [smem:[%s74]] 512
    %s76 = scalar_lea.smem [#allocation12], 2
    %77 = sst [smem:[%s76]] 4
    %s78 = scalar_lea.smem [#allocation12], 3
    %79 = sst [smem:[%s78]] 64
    %s80 = scalar_lea.smem [#allocation12], 4
    %81 = sst [smem:[%s80]] 128
    %s82 = scalar_lea.smem [#allocation12], 5
    %83 = sst [smem:[%s82]] 2
    %s84 = scalar_lea.smem [#allocation12], 6
    %85 = sst [smem:[%s84]] 256
    %s86 = scalar_lea.smem [#allocation12], 7
    %87 = sst [smem:[%s86]] 64
    %s88 = scalar_lea.smem [#allocation12], 8
    %89 = sst [smem:[%s88]] 4
    %91 = dma.general %s10, 24576, %s70, [#allocation8], [#allocation11], [#allocation12], %s68, 0
    %s92 = scalar_lea.sflag [#allocation8], 1
    %s94 = sshll.u32 1, 14
    %s95 = sxor.u32 4294967295, %s94
    %s97 = sadd.s32 2, %s61
    %s99 = sshll.u32 7, 26
    %s100 = sxor.u32 4294967295, %s99
    %s101 = sand.u32 0, %s100
    %s102 = sshll.u32 %s97, 26
    %s103 = sor.u32 %s101, %s102
    %s104 = sshll.u32 [#allocation4], 4
    %s105 = int_to_ptr.vmem [resolvable:$true] %s104
    %108 = sst [smem:[#allocation14]] 512
    %s109 = scalar_lea.smem [#allocation14], 1
    %110 = sst [smem:[%s109]] 512
    %s111 = scalar_lea.smem [#allocation14], 2
    %112 = sst [smem:[%s111]] 4
    %s113 = scalar_lea.smem [#allocation14], 3
    %114 = sst [smem:[%s113]] 64
    %s115 = scalar_lea.smem [#allocation14], 4
    %116 = sst [smem:[%s115]] 128
    %s117 = scalar_lea.smem [#allocation14], 5
    %118 = sst [smem:[%s117]] 2
    %s119 = scalar_lea.smem [#allocation14], 6
    %120 = sst [smem:[%s119]] 256
    %s121 = scalar_lea.smem [#allocation14], 7
    %122 = sst [smem:[%s121]] 64
    %s123 = scalar_lea.smem [#allocation14], 8
    %124 = sst [smem:[%s123]] 4
    %126 = dma.general %s13, 16384, %s105, %s92, [#allocation13], [#allocation14], %s103, 0
    %v127 = vld [vmem:[%s0] sm:$0xff]
    %v128 = vld [vmem:[%s0 + $0x8] sm:$0xff]
    %v129 = vld [vmem:[%s0 + $0x10] sm:$0xff]
    %v130 = vld [vmem:[%s0 + $0x18] sm:$0xff]
    %v131 = vld [vmem:[%s0 + $0x20] sm:$0xff]
    %v132 = vld [vmem:[%s0 + $0x28] sm:$0xff]
    %v133 = vld [vmem:[%s0 + $0x30] sm:$0xff]
    %v134 = vld [vmem:[%s0 + $0x38] sm:$0xff]
    %v135 = vld [vmem:[%s0 + $0x40] sm:$0xff]
    %v136 = vld [vmem:[%s0 + $0x48] sm:$0xff]
    %v137 = vld [vmem:[%s0 + $0x50] sm:$0xff]
    %v138 = vld [vmem:[%s0 + $0x58] sm:$0xff]
    %v139 = vld [vmem:[%s0 + $0x60] sm:$0xff]
    %v140 = vld [vmem:[%s0 + $0x68] sm:$0xff]
    %v141 = vld [vmem:[%s0 + $0x70] sm:$0xff]
    %v142 = vld [vmem:[%s0 + $0x78] sm:$0xff]
    %v143 = vld [vmem:[%s2] sm:$0x1]
    %v144 = vld [vmem:[%s3] sm:$0x1]
    %v145 = vrot.slane %v127, 1
    %v146 = vrot.slane %v128, 1
    %v147 = vrot.slane %v129, 1
    %v148 = vrot.slane %v130, 1
    %v149 = vrot.slane %v131, 1
    %v150 = vrot.slane %v132, 1
    %v151 = vrot.slane %v133, 1
    %v152 = vrot.slane %v134, 1
    %v153 = vrot.slane %v135, 1
    %v154 = vrot.slane %v136, 1
    %v155 = vrot.slane %v137, 1
    %v156 = vrot.slane %v138, 1
    %v157 = vrot.slane %v139, 1
    %v158 = vrot.slane %v140, 1
    %v159 = vrot.slane %v141, 1
    %v160 = vrot.slane %v142, 1
    %v161 = vlaneseq
    %v162 = vshrl.u32 %v161, 7
    %vm163 = vcmp.lt.s32.totalorder %v162, 7
    %v164 = vsel %vm163, %v159, %v160
    %v165 = vsel %vm163, %v158, %v159
    %v166 = vsel %vm163, %v157, %v158
    %v167 = vsel %vm163, %v156, %v157
    %v168 = vsel %vm163, %v155, %v156
    %v169 = vsel %vm163, %v154, %v155
    %v170 = vsel %vm163, %v153, %v154
    %v171 = vsel %vm163, %v152, %v153
    %v172 = vsel %vm163, %v151, %v152
    %v173 = vsel %vm163, %v150, %v151
    %v174 = vsel %vm163, %v149, %v150
    %v175 = vsel %vm163, %v148, %v149
    %v176 = vsel %vm163, %v147, %v148
    %v177 = vsel %vm163, %v146, %v147
    %v178 = vsel %vm163, %v145, %v146
    %v179 = vsel %vm163, %v160, %v145
    %v180 = vrot.slane %v127, 2
    %v181 = vrot.slane %v128, 2
    %v182 = vrot.slane %v129, 2
    %v183 = vrot.slane %v130, 2
    %v184 = vrot.slane %v131, 2
    %v185 = vrot.slane %v132, 2
    %v186 = vrot.slane %v133, 2
    %v187 = vrot.slane %v134, 2
    %v188 = vrot.slane %v135, 2
    %v189 = vrot.slane %v136, 2
    %v190 = vrot.slane %v137, 2
    %v191 = vrot.slane %v138, 2
    %v192 = vrot.slane %v139, 2
    %v193 = vrot.slane %v140, 2
    %v194 = vrot.slane %v141, 2
    %v195 = vrot.slane %v142, 2
    %vm196 = vcmp.lt.s32.totalorder %v162, 6
    %v197 = vsel %vm196, %v194, %v195
    %v198 = vsel %vm196, %v193, %v194
    %v199 = vsel %vm196, %v192, %v193
    %v200 = vsel %vm196, %v191, %v192
    %v201 = vsel %vm196, %v190, %v191
    %v202 = vsel %vm196, %v189, %v190
    %v203 = vsel %vm196, %v188, %v189
    %v204 = vsel %vm196, %v187, %v188
    %v205 = vsel %vm196, %v186, %v187
    %v206 = vsel %vm196, %v185, %v186
    %v207 = vsel %vm196, %v184, %v185
    %v208 = vsel %vm196, %v183, %v184
    %v209 = vsel %vm196, %v182, %v183
    %v210 = vsel %vm196, %v181, %v182
    %v211 = vsel %vm196, %v180, %v181
    %v212 = vsel %vm196, %v195, %v180
    %229 = vrot.lane.b32.xlu0 %v178, 5
    %v230 = vpop.permute.xlu0 %229
    %231 = vrot.lane.b32.xlu0 %v177, 5
    %v232 = vpop.permute.xlu0 %231
    %233 = vrot.lane.b32.xlu0 %v176, 5
    %v234 = vpop.permute.xlu0 %233
    %235 = vrot.lane.b32.xlu0 %v175, 5
    %v236 = vpop.permute.xlu0 %235
    %237 = vrot.lane.b32.xlu0 %v174, 5
    %v238 = vpop.permute.xlu0 %237
    %239 = vrot.lane.b32.xlu0 %v173, 5
    %v240 = vpop.permute.xlu0 %239
    %241 = vrot.lane.b32.xlu0 %v172, 5
    %v242 = vpop.permute.xlu0 %241
    %243 = vrot.lane.b32.xlu0 %v171, 5
    %v244 = vpop.permute.xlu0 %243
    %245 = vrot.lane.b32.xlu0 %v170, 5
    %v246 = vpop.permute.xlu0 %245
    %247 = vrot.lane.b32.xlu0 %v169, 5
    %v248 = vpop.permute.xlu0 %247
    %249 = vrot.lane.b32.xlu0 %v168, 5
    %v250 = vpop.permute.xlu0 %249
    %251 = vrot.lane.b32.xlu0 %v167, 5
    %v252 = vpop.permute.xlu0 %251
    %253 = vrot.lane.b32.xlu0 %v166, 5
    %v254 = vpop.permute.xlu0 %253
    %255 = vrot.lane.b32.xlu0 %v165, 5
    %v256 = vpop.permute.xlu0 %255
    %257 = vrot.lane.b32.xlu0 %v164, 5
    %v258 = vpop.permute.xlu0 %257
    %259 = vrot.lane.b32.xlu0 %v179, 5
    %v260 = vpop.permute.xlu0 %259
    %293 = vrot.lane.b32.xlu0 %v211, 10
    %v294 = vpop.permute.xlu0 %293
    %295 = vrot.lane.b32.xlu0 %v210, 10
    %v296 = vpop.permute.xlu0 %295
    %297 = vrot.lane.b32.xlu0 %v209, 10
    %v298 = vpop.permute.xlu0 %297
    %299 = vrot.lane.b32.xlu0 %v208, 10
    %v300 = vpop.permute.xlu0 %299
    %301 = vrot.lane.b32.xlu0 %v207, 10
    %v302 = vpop.permute.xlu0 %301
    %303 = vrot.lane.b32.xlu0 %v206, 10
    %v304 = vpop.permute.xlu0 %303
    %305 = vrot.lane.b32.xlu0 %v205, 10
    %v306 = vpop.permute.xlu0 %305
    %307 = vrot.lane.b32.xlu0 %v204, 10
    %v308 = vpop.permute.xlu0 %307
    %309 = vrot.lane.b32.xlu0 %v203, 10
    %v310 = vpop.permute.xlu0 %309
    %311 = vrot.lane.b32.xlu0 %v202, 10
    %v312 = vpop.permute.xlu0 %311
    %313 = vrot.lane.b32.xlu0 %v201, 10
    %v314 = vpop.permute.xlu0 %313
    %315 = vrot.lane.b32.xlu0 %v200, 10
    %v316 = vpop.permute.xlu0 %315
    %317 = vrot.lane.b32.xlu0 %v199, 10
    %v318 = vpop.permute.xlu0 %317
    %319 = vrot.lane.b32.xlu0 %v198, 10
    %v320 = vpop.permute.xlu0 %319
    %321 = vrot.lane.b32.xlu0 %v197, 10
    %v322 = vpop.permute.xlu0 %321
    %323 = vrot.lane.b32.xlu0 %v212, 10
    %v324 = vpop.permute.xlu0 %323
    %vm341 = vcmask 39936
    %v342 = vsel %vm341, %v127, %v230
    %v343 = vsel %vm341, %v128, %v232
    %v344 = vsel %vm341, %v129, %v234
    %v345 = vsel %vm341, %v130, %v236
    %v346 = vsel %vm341, %v131, %v238
    %v347 = vsel %vm341, %v132, %v240
    %v348 = vsel %vm341, %v133, %v242
    %v349 = vsel %vm341, %v134, %v244
    %v350 = vsel %vm341, %v135, %v246
    %v351 = vsel %vm341, %v136, %v248
    %v352 = vsel %vm341, %v137, %v250
    %v353 = vsel %vm341, %v138, %v252
    %v354 = vsel %vm341, %v139, %v254
    %v355 = vsel %vm341, %v140, %v256
    %v356 = vsel %vm341, %v141, %v258
    %v357 = vsel %vm341, %v142, %v260
    %vm358 = vcmask 80896
    %v359 = vsel %vm358, %v342, %v294
    %v360 = vsel %vm358, %v343, %v296
    %v361 = vsel %vm358, %v344, %v298
    %v362 = vsel %vm358, %v345, %v300
    %v363 = vsel %vm358, %v346, %v302
    %v364 = vsel %vm358, %v347, %v304
    %v365 = vsel %vm358, %v348, %v306
    %v366 = vsel %vm358, %v349, %v308
    %v367 = vsel %vm358, %v350, %v310
    %v368 = vsel %vm358, %v351, %v312
    %v369 = vsel %vm358, %v352, %v314
    %v370 = vsel %vm358, %v353, %v316
    %v371 = vsel %vm358, %v354, %v318
    %v372 = vsel %vm358, %v355, %v320
    %v373 = vsel %vm358, %v356, %v322
    %v374 = vsel %vm358, %v357, %v324
    %v375 = vld [vmem:[%s1] sm:$0xff]
    %v376 = vld [vmem:[%s1 + $0x8] sm:$0x7f]
    %vm377 = vcmask 121856
    %v379 = vsel %vm377, %v359, 0
    %v382 = vsel %vm377, %v360, 0
    %v385 = vsel %vm377, %v361, 0
    %v388 = vsel %vm377, %v362, 0
    %v391 = vsel %vm377, %v363, 0
    %v394 = vsel %vm377, %v364, 0
    %v397 = vsel %vm377, %v365, 0
    %v400 = vsel %vm377, %v366, 0
    %v403 = vsel %vm377, %v367, 0
    %v406 = vsel %vm377, %v368, 0
    %v409 = vsel %vm377, %v369, 0
    %v412 = vsel %vm377, %v370, 0
    %v415 = vsel %vm377, %v371, 0
    %v418 = vsel %vm377, %v372, 0
    %v421 = vsel %vm377, %v373, 0
    %v424 = vsel %vm377, %v374, 0
    %vm426 = vcmask 1046528
    %v428 = vsel %vm426, %v376, 0
    %430 = vmatprep.subr.mxu0 0.0
    %431 = vmatpush1.msra.mxu0 %v375
    %432 = vmatprep.subr.mxu0 0.0
    %433 = vmatpush1.msra.mxu0 %v428
    %434 = vmatprep.subr.mxu0 0.0
    %435 = vmatpush1.msra.mxu0 0.0
    %436 = vmatprep.subr.mxu0 0.0
    %437 = vmatpush1.msra.mxu0 0.0
    %438 = vmatprep.subr.mxu0 0.0
    %439 = vmatpush1.msra.mxu0 0.0
    %440 = vmatprep.subr.mxu0 0.0
    %441 = vmatpush1.msra.mxu0 0.0
    %442 = vmatprep.subr.mxu0 0.0
    %443 = vmatpush1.msra.mxu0 0.0
    %444 = vmatprep.subr.mxu0 0.0
    %445 = vmatpush1.msra.mxu0 0.0
    %446 = vmatprep.subr.mxu0 0.0
    %447 = vmatpush1.msra.mxu0 0.0
    %448 = vmatprep.subr.mxu0 0.0
    %449 = vmatpush1.msra.mxu0 0.0
    %450 = vmatprep.subr.mxu0 0.0
    %451 = vmatpush1.msra.mxu0 0.0
    %452 = vmatprep.subr.mxu0 0.0
    %453 = vmatpush1.msra.mxu0 0.0
    %454 = vmatprep.subr.mxu0 0.0
    %455 = vmatpush1.msra.mxu0 0.0
    %456 = vmatprep.subr.mxu0 0.0
    %457 = vmatpush1.msra.mxu0 0.0
    %458 = vmatprep.subr.mxu0 0.0
    %459 = vmatpush1.msra.mxu0 0.0
    %460 = vmatprep.subr.mxu0 0.0
    %461 = vmatpush1.msra.mxu0 0.0
    %462 = vmatprep.subr.mxu0 0.0
    %463 = vmatpush1.msra.mxu0 0.0
    %464 = vmatprep.subr.mxu0 0.0
    %465 = vmatpush1.msra.mxu0 0.0
    %466 = vmatprep.subr.mxu0 0.0
    %467 = vmatpush1.msra.mxu0 0.0
    %468 = vmatprep.subr.mxu0 0.0
    %469 = vmatpush1.msra.mxu0 0.0
    %470 = vmatprep.subr.mxu0 0.0
    %471 = vmatpush1.msra.mxu0 0.0
    %472 = vmatprep.subr.mxu0 0.0
    %473 = vmatpush1.msra.mxu0 0.0
    %474 = vmatprep.subr.mxu0 0.0
    %475 = vmatpush1.msra.mxu0 0.0
    %476 = vmatprep.subr.mxu0 0.0
    %477 = vmatpush1.msra.mxu0 0.0
    %478 = vmatprep.subr.mxu0 0.0
    %479 = vmatpush1.msra.mxu0 0.0
    %480 = vmatprep.subr.mxu0 0.0
    %481 = vmatpush1.msra.mxu0 0.0
    %482 = vmatprep.subr.mxu0 0.0
    %483 = vmatpush1.msra.mxu0 0.0
    %484 = vmatprep.subr.mxu0 0.0
    %485 = vmatpush1.msra.mxu0 0.0
    %486 = vmatprep.subr.mxu0 0.0
    %487 = vmatpush1.msra.mxu0 0.0
    %488 = vmatprep.subr.mxu0 0.0
    %489 = vmatpush1.msra.mxu0 0.0
    %490 = vmatprep.subr.mxu0 0.0
    %491 = vmatpush1.msra.mxu0 0.0
    %492 = vmatprep.subr.mxu0 0.0
    %493 = vmatpush1.msra.mxu0 0.0
    %494 = vmatprep.mubr.f32.mxu0 0.0
    %495 = vmatmul.mubr.f32.gmra.mrb[0].mxu0 %v379
    %v496 = vpop.f32.mrb[0].mxu0
    %v497 = vadd.f32 0.0, %v496
    %v498 = vpop.f32.mrb[0].mxu0
    %499 = vmatprep.mubr.f32.mxu0 0.0
    %500 = vmatmul.mubr.f32.gmra.mrb[0].mxu0 %v382
    %v501 = vpop.f32.mrb[0].mxu0
    %v502 = vadd.f32 0.0, %v501
    %v503 = vpop.f32.mrb[0].mxu0
    %504 = vmatprep.mubr.f32.mxu0 0.0
    %505 = vmatmul.mubr.f32.gmra.mrb[0].mxu0 %v385
    %v506 = vpop.f32.mrb[0].mxu0
    %v507 = vadd.f32 0.0, %v506
    %v508 = vpop.f32.mrb[0].mxu0
    %509 = vmatprep.mubr.f32.mxu0 0.0
    %510 = vmatmul.mubr.f32.gmra.mrb[0].mxu0 %v388
    %v511 = vpop.f32.mrb[0].mxu0
    %v512 = vadd.f32 0.0, %v511
    %v513 = vpop.f32.mrb[0].mxu0
    %514 = vmatprep.mubr.f32.mxu0 0.0
    %515 = vmatmul.mubr.f32.gmra.mrb[0].mxu0 %v391
    %v516 = vpop.f32.mrb[0].mxu0
    %v517 = vadd.f32 0.0, %v516
    %v518 = vpop.f32.mrb[0].mxu0
    %519 = vmatprep.mubr.f32.mxu0 0.0
    %520 = vmatmul.mubr.f32.gmra.mrb[0].mxu0 %v394
    %v521 = vpop.f32.mrb[0].mxu0
    %v522 = vadd.f32 0.0, %v521
    %v523 = vpop.f32.mrb[0].mxu0
    %524 = vmatprep.mubr.f32.mxu0 0.0
    %525 = vmatmul.mubr.f32.gmra.mrb[0].mxu0 %v397
    %v526 = vpop.f32.mrb[0].mxu0
    %v527 = vadd.f32 0.0, %v526
    %v528 = vpop.f32.mrb[0].mxu0
    %529 = vmatprep.mubr.f32.mxu0 0.0
    %530 = vmatmul.mubr.f32.gmra.mrb[0].mxu0 %v400
    %v531 = vpop.f32.mrb[0].mxu0
    %v532 = vadd.f32 0.0, %v531
    %v533 = vpop.f32.mrb[0].mxu0
    %534 = vmatprep.mubr.f32.mxu0 0.0
    %535 = vmatmul.mubr.f32.gmra.mrb[0].mxu0 %v403
    %v536 = vpop.f32.mrb[0].mxu0
    %v537 = vadd.f32 0.0, %v536
    %v538 = vpop.f32.mrb[0].mxu0
    %539 = vmatprep.mubr.f32.mxu0 0.0
    %540 = vmatmul.mubr.f32.gmra.mrb[0].mxu0 %v406
    %v541 = vpop.f32.mrb[0].mxu0
    %v542 = vadd.f32 0.0, %v541
    %v543 = vpop.f32.mrb[0].mxu0
    %544 = vmatprep.mubr.f32.mxu0 0.0
    %545 = vmatmul.mubr.f32.gmra.mrb[0].mxu0 %v409
    %v546 = vpop.f32.mrb[0].mxu0
    %v547 = vadd.f32 0.0, %v546
    %v548 = vpop.f32.mrb[0].mxu0
    %549 = vmatprep.mubr.f32.mxu0 0.0
    %550 = vmatmul.mubr.f32.gmra.mrb[0].mxu0 %v412
    %v551 = vpop.f32.mrb[0].mxu0
    %v552 = vadd.f32 0.0, %v551
    %v553 = vpop.f32.mrb[0].mxu0
    %554 = vmatprep.mubr.f32.mxu0 0.0
    %555 = vmatmul.mubr.f32.gmra.mrb[0].mxu0 %v415
    %v556 = vpop.f32.mrb[0].mxu0
    %v557 = vadd.f32 0.0, %v556
    %v558 = vpop.f32.mrb[0].mxu0
    %559 = vmatprep.mubr.f32.mxu0 0.0
    %560 = vmatmul.mubr.f32.gmra.mrb[0].mxu0 %v418
    %v561 = vpop.f32.mrb[0].mxu0
    %v562 = vadd.f32 0.0, %v561
    %v563 = vpop.f32.mrb[0].mxu0
    %564 = vmatprep.mubr.f32.mxu0 0.0
    %565 = vmatmul.mubr.f32.gmra.mrb[0].mxu0 %v421
    %v566 = vpop.f32.mrb[0].mxu0
    %v567 = vadd.f32 0.0, %v566
    %v568 = vpop.f32.mrb[0].mxu0
    %569 = vmatprep.mubr.f32.mxu0 0.0
    %570 = vmatmul.mubr.f32.gmra.mrb[0].mxu0 %v424
    %v571 = vpop.f32.mrb[0].mxu0
    %v572 = vadd.f32 0.0, %v571
    %v573 = vpop.f32.mrb[0].mxu0
    %574 = vdwg.mxu0
    %v576 = vlaneseq
    %v577 = vshrl.u32 %v576, 7
    %v578 = vsub.s32 0, %v577
    %v579 = vrot.slane %v143, %v578
    %v581 = vmul.f32 %v497, %v579
    %v582 = vmul.f32 %v502, %v579
    %v583 = vmul.f32 %v507, %v579
    %v584 = vmul.f32 %v512, %v579
    %v585 = vmul.f32 %v517, %v579
    %v586 = vmul.f32 %v522, %v579
    %v587 = vmul.f32 %v527, %v579
    %v588 = vmul.f32 %v532, %v579
    %v589 = vmul.f32 %v537, %v579
    %v590 = vmul.f32 %v542, %v579
    %v591 = vmul.f32 %v547, %v579
    %v592 = vmul.f32 %v552, %v579
    %v593 = vmul.f32 %v557, %v579
    %v594 = vmul.f32 %v562, %v579
    %v595 = vmul.f32 %v567, %v579
    %v596 = vmul.f32 %v572, %v579
    %v598 = vlaneseq
    %v599 = vshrl.u32 %v598, 7
    %v600 = vsub.s32 0, %v599
    %v601 = vrot.slane %v144, %v600
    %v603 = vadd.f32 %v581, %v601
    %v604 = vadd.f32 %v582, %v601
    %v605 = vadd.f32 %v583, %v601
    %v606 = vadd.f32 %v584, %v601
    %v607 = vadd.f32 %v585, %v601
    %v608 = vadd.f32 %v586, %v601
    %v609 = vadd.f32 %v587, %v601
    %v610 = vadd.f32 %v588, %v601
    %v611 = vadd.f32 %v589, %v601
    %v612 = vadd.f32 %v590, %v601
    %v613 = vadd.f32 %v591, %v601
    %v614 = vadd.f32 %v592, %v601
    %v615 = vadd.f32 %v593, %v601
    %v616 = vadd.f32 %v594, %v601
    %v617 = vadd.f32 %v595, %v601
    %v618 = vadd.f32 %v596, %v601
    %v619 = vmax.f32 %v603, 0.0
    %v620 = vmax.f32 %v604, 0.0
    %v621 = vmax.f32 %v605, 0.0
    %v622 = vmax.f32 %v606, 0.0
    %v623 = vmax.f32 %v607, 0.0
    %v624 = vmax.f32 %v608, 0.0
    %v625 = vmax.f32 %v609, 0.0
    %v626 = vmax.f32 %v610, 0.0
    %v627 = vmax.f32 %v611, 0.0
    %v628 = vmax.f32 %v612, 0.0
    %v629 = vmax.f32 %v613, 0.0
    %v630 = vmax.f32 %v614, 0.0
    %v631 = vmax.f32 %v615, 0.0
    %v632 = vmax.f32 %v616, 0.0
    %v633 = vmax.f32 %v617, 0.0
    %v634 = vmax.f32 %v618, 0.0
    %vm635 = vcmask 261120
    %636 = vst.msk [vmem:[#allocation5] sm:$0xff] %vm635, %v619
    %637 = vst.msk [vmem:[#allocation5 + $0x8] sm:$0xff] %vm635, %v620
    %638 = vst.msk [vmem:[#allocation5 + $0x10] sm:$0xff] %vm635, %v621
    %639 = vst.msk [vmem:[#allocation5 + $0x18] sm:$0xff] %vm635, %v622
    %640 = vst.msk [vmem:[#allocation5 + $0x20] sm:$0xff] %vm635, %v623
    %641 = vst.msk [vmem:[#allocation5 + $0x28] sm:$0xff] %vm635, %v624
    %642 = vst.msk [vmem:[#allocation5 + $0x30] sm:$0xff] %vm635, %v625
    %643 = vst.msk [vmem:[#allocation5 + $0x38] sm:$0xff] %vm635, %v626
    %644 = vst.msk [vmem:[#allocation5 + $0x40] sm:$0xff] %vm635, %v627
    %645 = vst.msk [vmem:[#allocation5 + $0x48] sm:$0xff] %vm635, %v628
    %646 = vst.msk [vmem:[#allocation5 + $0x50] sm:$0xff] %vm635, %v629
    %647 = vst.msk [vmem:[#allocation5 + $0x58] sm:$0xff] %vm635, %v630
    %648 = vst.msk [vmem:[#allocation5 + $0x60] sm:$0xff] %vm635, %v631
    %649 = vst.msk [vmem:[#allocation5 + $0x68] sm:$0xff] %vm635, %v632
    %650 = vst.msk [vmem:[#allocation5 + $0x70] sm:$0xff] %vm635, %v633
    %651 = vst.msk [vmem:[#allocation5 + $0x78] sm:$0xff] %vm635, %v634
    %v652 = vld [vmem:[#allocation5] ss:$2 sm:$0xff]
    %s653 = scalar_lea.vmem [#allocation5], 16
    %v654 = vld [vmem:[%s653] ss:$2 sm:$0xff]
    %s655 = scalar_lea.vmem [#allocation5], 32
    %v656 = vld [vmem:[%s655] ss:$2 sm:$0xff]
    %s657 = scalar_lea.vmem [#allocation5], 48
    %v658 = vld [vmem:[%s657] ss:$2 sm:$0xff]
    %s659 = scalar_lea.vmem [#allocation5], 64
    %v660 = vld [vmem:[%s659] ss:$2 sm:$0xff]
    %s661 = scalar_lea.vmem [#allocation5], 80
    %v662 = vld [vmem:[%s661] ss:$2 sm:$0xff]
    %s663 = scalar_lea.vmem [#allocation5], 96
    %v664 = vld [vmem:[%s663] ss:$2 sm:$0xff]
    %s665 = scalar_lea.vmem [#allocation5], 112
    %v666 = vld [vmem:[%s665] ss:$2 sm:$0xff]
    %s667 = scalar_lea.vmem [#allocation5], 1
    %v668 = vld [vmem:[%s667] ss:$2 sm:$0xff]
    %s669 = scalar_lea.vmem [#allocation5], 17
    %v670 = vld [vmem:[%s669] ss:$2 sm:$0xff]
    %s671 = scalar_lea.vmem [#allocation5], 33
    %v672 = vld [vmem:[%s671] ss:$2 sm:$0xff]
    %s673 = scalar_lea.vmem [#allocation5], 49
    %v674 = vld [vmem:[%s673] ss:$2 sm:$0xff]
    %s675 = scalar_lea.vmem [#allocation5], 65
    %v676 = vld [vmem:[%s675] ss:$2 sm:$0xff]
    %s677 = scalar_lea.vmem [#allocation5], 81
    %v678 = vld [vmem:[%s677] ss:$2 sm:$0xff]
    %s679 = scalar_lea.vmem [#allocation5], 97
    %v680 = vld [vmem:[%s679] ss:$2 sm:$0xff]
    %s681 = scalar_lea.vmem [#allocation5], 113
    %v682 = vld [vmem:[%s681] ss:$2 sm:$0xff]
    %v683 = vmax.f32 %v652, %v668
    %v684 = vmax.f32 %v654, %v670
    %v685 = vmax.f32 %v656, %v672
    %v686 = vmax.f32 %v658, %v674
    %v687 = vmax.f32 %v660, %v676
    %v688 = vmax.f32 %v662, %v678
    %v689 = vmax.f32 %v664, %v680
    %v690 = vmax.f32 %v666, %v682
    %v691 = vld [vmem:[%s5] sm:$0x1]
    %v692 = vld [vmem:[%s6] sm:$0x1]
    %v693 = vrot.slane %v683, 1
    %v694 = vrot.slane %v684, 1
    %v695 = vrot.slane %v685, 1
    %v696 = vrot.slane %v686, 1
    %v697 = vrot.slane %v687, 1
    %v698 = vrot.slane %v688, 1
    %v699 = vrot.slane %v689, 1
    %v700 = vrot.slane %v690, 1
    %v701 = vsel %vm163, %v699, %v700
    %v702 = vsel %vm163, %v698, %v699
    %v703 = vsel %vm163, %v697, %v698
    %v704 = vsel %vm163, %v696, %v697
    %v705 = vsel %vm163, %v695, %v696
    %v706 = vsel %vm163, %v694, %v695
    %v707 = vsel %vm163, %v693, %v694
    %v708 = vsel %vm163, %v700, %v693
    %v709 = vrot.slane %v683, 2
    %v710 = vrot.slane %v684, 2
    %v711 = vrot.slane %v685, 2
    %v712 = vrot.slane %v686, 2
    %v713 = vrot.slane %v687, 2
    %v714 = vrot.slane %v688, 2
    %v715 = vrot.slane %v689, 2
    %v716 = vrot.slane %v690, 2
    %v717 = vsel %vm196, %v715, %v716
    %v718 = vsel %vm196, %v714, %v715
    %v719 = vsel %vm196, %v713, %v714
    %v720 = vsel %vm196, %v712, %v713
    %v721 = vsel %vm196, %v711, %v712
    %v722 = vsel %vm196, %v710, %v711
    %v723 = vsel %vm196, %v709, %v710
    %v724 = vsel %vm196, %v716, %v709
    %733 = vrot.lane.b32.xlu0 %v707, 32
    %v734 = vpop.permute.xlu0 %733
    %735 = vrot.lane.b32.xlu0 %v706, 32
    %v736 = vpop.permute.xlu0 %735
    %737 = vrot.lane.b32.xlu0 %v705, 32
    %v738 = vpop.permute.xlu0 %737
    %739 = vrot.lane.b32.xlu0 %v704, 32
    %v740 = vpop.permute.xlu0 %739
    %741 = vrot.lane.b32.xlu0 %v703, 32
    %v742 = vpop.permute.xlu0 %741
    %743 = vrot.lane.b32.xlu0 %v702, 32
    %v744 = vpop.permute.xlu0 %743
    %745 = vrot.lane.b32.xlu0 %v701, 32
    %v746 = vpop.permute.xlu0 %745
    %747 = vrot.lane.b32.xlu0 %v708, 32
    %v748 = vpop.permute.xlu0 %747
    %765 = vrot.lane.b32.xlu0 %v723, 64
    %v766 = vpop.permute.xlu0 %765
    %767 = vrot.lane.b32.xlu0 %v722, 64
    %v768 = vpop.permute.xlu0 %767
    %769 = vrot.lane.b32.xlu0 %v721, 64
    %v770 = vpop.permute.xlu0 %769
    %771 = vrot.lane.b32.xlu0 %v720, 64
    %v772 = vpop.permute.xlu0 %771
    %773 = vrot.lane.b32.xlu0 %v719, 64
    %v774 = vpop.permute.xlu0 %773
    %775 = vrot.lane.b32.xlu0 %v718, 64
    %v776 = vpop.permute.xlu0 %775
    %777 = vrot.lane.b32.xlu0 %v717, 64
    %v778 = vpop.permute.xlu0 %777
    %779 = vrot.lane.b32.xlu0 %v724, 64
    %v780 = vpop.permute.xlu0 %779
    %v789 = vsel %vm635, %v683, %v734
    %v790 = vsel %vm635, %v684, %v736
    %v791 = vsel %vm635, %v685, %v738
    %v792 = vsel %vm635, %v686, %v740
    %v793 = vsel %vm635, %v687, %v742
    %v794 = vsel %vm635, %v688, %v744
    %v795 = vsel %vm635, %v689, %v746
    %v796 = vsel %vm635, %v690, %v748
    %vm797 = vcmask 523264
    %v798 = vsel %vm797, %v789, %v766
    %v799 = vsel %vm797, %v790, %v768
    %v800 = vsel %vm797, %v791, %v770
    %v801 = vsel %vm797, %v792, %v772
    %v802 = vsel %vm797, %v793, %v774
    %v803 = vsel %vm797, %v794, %v776
    %v804 = vsel %vm797, %v795, %v778
    %v805 = vsel %vm797, %v796, %v780
    %v806 = vld [vmem:[%s4] sm:$0xff]
    %v807 = vld [vmem:[%s4 + $0x8] sm:$0xff]
    %v808 = vld [vmem:[%s4 + $0x10] sm:$0xff]
    %v809 = vld [vmem:[%s4 + $0x18] sm:$0xff]
    %v810 = vld [vmem:[%s4 + $0x20] sm:$0xff]
    %v811 = vld [vmem:[%s4 + $0x28] sm:$0xff]
    %v812 = vld [vmem:[%s4 + $0x30] sm:$0xff]
    %v813 = vld [vmem:[%s4 + $0x38] sm:$0xff]
    %v814 = vld [vmem:[%s4 + $0x40] sm:$0xff]
    %v815 = vld [vmem:[%s4 + $0x48] sm:$0xff]
    %v816 = vld [vmem:[%s4 + $0x50] sm:$0xff]
    %v817 = vld [vmem:[%s4 + $0x58] sm:$0xff]
    %vm818 = vcmask 785408
    %v820 = vsel %vm818, %v798, 0
    %v823 = vsel %vm818, %v799, 0
    %v826 = vsel %vm818, %v800, 0
    %v829 = vsel %vm818, %v801, 0
    %v832 = vsel %vm818, %v802, 0
    %v835 = vsel %vm818, %v803, 0
    %v838 = vsel %vm818, %v804, 0
    %v841 = vsel %vm818, %v805, 0
    %843 = vmatprep.subr.mxu0 0.0
    %844 = vmatpush1.msra.mxu0 %v806
    %845 = vmatprep.subr.mxu0 0.0
    %846 = vmatpush1.msra.mxu0 %v807
    %847 = vmatprep.subr.mxu0 0.0
    %848 = vmatpush1.msra.mxu0 %v808
    %849 = vmatprep.subr.mxu0 0.0
    %850 = vmatpush1.msra.mxu0 %v809
    %851 = vmatprep.subr.mxu0 0.0
    %852 = vmatpush1.msra.mxu0 %v810
    %853 = vmatprep.subr.mxu0 0.0
    %854 = vmatpush1.msra.mxu0 %v811
    %855 = vmatprep.subr.mxu0 0.0
    %856 = vmatpush1.msra.mxu0 %v812
    %857 = vmatprep.subr.mxu0 0.0
    %858 = vmatpush1.msra.mxu0 %v813
    %859 = vmatprep.subr.mxu0 0.0
    %860 = vmatpush1.msra.mxu0 %v814
    %861 = vmatprep.subr.mxu0 0.0
    %862 = vmatpush1.msra.mxu0 %v815
    %863 = vmatprep.subr.mxu0 0.0
    %864 = vmatpush1.msra.mxu0 %v816
    %865 = vmatprep.subr.mxu0 0.0
    %866 = vmatpush1.msra.mxu0 %v817
    %867 = vmatprep.subr.mxu0 0.0
    %868 = vmatpush1.msra.mxu0 0.0
    %869 = vmatprep.subr.mxu0 0.0
    %870 = vmatpush1.msra.mxu0 0.0
    %871 = vmatprep.subr.mxu0 0.0
    %872 = vmatpush1.msra.mxu0 0.0
    %873 = vmatprep.subr.mxu0 0.0
    %874 = vmatpush1.msra.mxu0 0.0
    %875 = vmatprep.subr.mxu0 0.0
    %876 = vmatpush1.msra.mxu0 0.0
    %877 = vmatprep.subr.mxu0 0.0
    %878 = vmatpush1.msra.mxu0 0.0
    %879 = vmatprep.subr.mxu0 0.0
    %880 = vmatpush1.msra.mxu0 0.0
    %881 = vmatprep.subr.mxu0 0.0
    %882 = vmatpush1.msra.mxu0 0.0
    %883 = vmatprep.subr.mxu0 0.0
    %884 = vmatpush1.msra.mxu0 0.0
    %885 = vmatprep.subr.mxu0 0.0
    %886 = vmatpush1.msra.mxu0 0.0
    %887 = vmatprep.subr.mxu0 0.0
    %888 = vmatpush1.msra.mxu0 0.0
    %889 = vmatprep.subr.mxu0 0.0
    %890 = vmatpush1.msra.mxu0 0.0
    %891 = vmatprep.subr.mxu0 0.0
    %892 = vmatpush1.msra.mxu0 0.0
    %893 = vmatprep.subr.mxu0 0.0
    %894 = vmatpush1.msra.mxu0 0.0
    %895 = vmatprep.subr.mxu0 0.0
    %896 = vmatpush1.msra.mxu0 0.0
    %897 = vmatprep.subr.mxu0 0.0
    %898 = vmatpush1.msra.mxu0 0.0
    %899 = vmatprep.subr.mxu0 0.0
    %900 = vmatpush1.msra.mxu0 0.0
    %901 = vmatprep.subr.mxu0 0.0
    %902 = vmatpush1.msra.mxu0 0.0
    %903 = vmatprep.subr.mxu0 0.0
    %904 = vmatpush1.msra.mxu0 0.0
    %905 = vmatprep.subr.mxu0 0.0
    %906 = vmatpush1.msra.mxu0 0.0
    %907 = vmatprep.mubr.f32.mxu0 0.0
    %908 = vmatmul.mubr.f32.gmra.mrb[0].mxu0 %v820
    %v909 = vpop.f32.mrb[0].mxu0
    %v910 = vadd.f32 0.0, %v909
    %v911 = vpop.f32.mrb[0].mxu0
    %912 = vmatprep.mubr.f32.mxu0 0.0
    %913 = vmatmul.mubr.f32.gmra.mrb[0].mxu0 %v823
    %v914 = vpop.f32.mrb[0].mxu0
    %v915 = vadd.f32 0.0, %v914
    %v916 = vpop.f32.mrb[0].mxu0
    %917 = vmatprep.mubr.f32.mxu0 0.0
    %918 = vmatmul.mubr.f32.gmra.mrb[0].mxu0 %v826
    %v919 = vpop.f32.mrb[0].mxu0
    %v920 = vadd.f32 0.0, %v919
    %v921 = vpop.f32.mrb[0].mxu0
    %922 = vmatprep.mubr.f32.mxu0 0.0
    %923 = vmatmul.mubr.f32.gmra.mrb[0].mxu0 %v829
    %v924 = vpop.f32.mrb[0].mxu0
    %v925 = vadd.f32 0.0, %v924
    %v926 = vpop.f32.mrb[0].mxu0
    %927 = vmatprep.mubr.f32.mxu0 0.0
    %928 = vmatmul.mubr.f32.gmra.mrb[0].mxu0 %v832
    %v929 = vpop.f32.mrb[0].mxu0
    %v930 = vadd.f32 0.0, %v929
    %v931 = vpop.f32.mrb[0].mxu0
    %932 = vmatprep.mubr.f32.mxu0 0.0
    %933 = vmatmul.mubr.f32.gmra.mrb[0].mxu0 %v835
    %v934 = vpop.f32.mrb[0].mxu0
    %v935 = vadd.f32 0.0, %v934
    %v936 = vpop.f32.mrb[0].mxu0
    %937 = vmatprep.mubr.f32.mxu0 0.0
    %938 = vmatmul.mubr.f32.gmra.mrb[0].mxu0 %v838
    %v939 = vpop.f32.mrb[0].mxu0
    %v940 = vadd.f32 0.0, %v939
    %v941 = vpop.f32.mrb[0].mxu0
    %942 = vmatprep.mubr.f32.mxu0 0.0
    %943 = vmatmul.mubr.f32.gmra.mrb[0].mxu0 %v841
    %v944 = vpop.f32.mrb[0].mxu0
    %v945 = vadd.f32 0.0, %v944
    %v946 = vpop.f32.mrb[0].mxu0
    %947 = vdwg.mxu0
    %v949 = vlaneseq
    %v950 = vshrl.u32 %v949, 7
    %v951 = vsub.s32 0, %v950
    %v952 = vrot.slane %v691, %v951
    %v954 = vmul.f32 %v910, %v952
    %v955 = vmul.f32 %v915, %v952
    %v956 = vmul.f32 %v920, %v952
    %v957 = vmul.f32 %v925, %v952
    %v958 = vmul.f32 %v930, %v952
    %v959 = vmul.f32 %v935, %v952
    %v960 = vmul.f32 %v940, %v952
    %v961 = vmul.f32 %v945, %v952
    %v963 = vlaneseq
    %v964 = vshrl.u32 %v963, 7
    %v965 = vsub.s32 0, %v964
    %v966 = vrot.slane %v692, %v965
    %v968 = vadd.f32 %v954, %v966
    %v969 = vadd.f32 %v955, %v966
    %v970 = vadd.f32 %v956, %v966
    %v971 = vadd.f32 %v957, %v966
    %v972 = vadd.f32 %v958, %v966
    %v973 = vadd.f32 %v959, %v966
    %v974 = vadd.f32 %v960, %v966
    %v975 = vadd.f32 %v961, %v966
    %v976 = vmax.f32 %v968, 0.0
    %v977 = vmax.f32 %v969, 0.0
    %v978 = vmax.f32 %v970, 0.0
    %v979 = vmax.f32 %v971, 0.0
    %v980 = vmax.f32 %v972, 0.0
    %v981 = vmax.f32 %v973, 0.0
    %v982 = vmax.f32 %v974, 0.0
    %v983 = vmax.f32 %v975, 0.0
    %984 = vst.msk [vmem:[#allocation6] sm:$0xff] %vm797, %v976
    %985 = vst.msk [vmem:[#allocation6 + $0x8] sm:$0xff] %vm797, %v977
    %986 = vst.msk [vmem:[#allocation6 + $0x10] sm:$0xff] %vm797, %v978
    %987 = vst.msk [vmem:[#allocation6 + $0x18] sm:$0xff] %vm797, %v979
    %988 = vst.msk [vmem:[#allocation6 + $0x20] sm:$0xff] %vm797, %v980
    %989 = vst.msk [vmem:[#allocation6 + $0x28] sm:$0xff] %vm797, %v981
    %990 = vst.msk [vmem:[#allocation6 + $0x30] sm:$0xff] %vm797, %v982
    %991 = vst.msk [vmem:[#allocation6 + $0x38] sm:$0xff] %vm797, %v983
    %v992 = vld [vmem:[#allocation6] ss:$2 sm:$0xff]
    %s993 = scalar_lea.vmem [#allocation6], 16
    %v994 = vld [vmem:[%s993] ss:$2 sm:$0xff]
    %s995 = scalar_lea.vmem [#allocation6], 32
    %v996 = vld [vmem:[%s995] ss:$2 sm:$0xff]
    %s997 = scalar_lea.vmem [#allocation6], 48
    %v998 = vld [vmem:[%s997] ss:$2 sm:$0xff]
    %s999 = scalar_lea.vmem [#allocation6], 1
    %v1000 = vld [vmem:[%s999] ss:$2 sm:$0xff]
    %s1001 = scalar_lea.vmem [#allocation6], 17
    %v1002 = vld [vmem:[%s1001] ss:$2 sm:$0xff]
    %s1003 = scalar_lea.vmem [#allocation6], 33
    %v1004 = vld [vmem:[%s1003] ss:$2 sm:$0xff]
    %s1005 = scalar_lea.vmem [#allocation6], 49
    %v1006 = vld [vmem:[%s1005] ss:$2 sm:$0xff]
    %v1007 = vmax.f32 %v992, %v1000
    %v1008 = vmax.f32 %v994, %v1002
    %v1009 = vmax.f32 %v996, %v1004
    %v1010 = vmax.f32 %v998, %v1006
    %v1011 = vld [vmem:[%s8] sm:$0x1]
    %v1012 = vld [vmem:[%s9] sm:$0x1]
    %v1013 = vrot.slane %v1007, 1
    %v1014 = vrot.slane %v1008, 1
    %v1015 = vrot.slane %v1009, 1
    %v1016 = vrot.slane %v1010, 1
    %v1017 = vsel %vm163, %v1015, %v1016
    %v1018 = vsel %vm163, %v1014, %v1015
    %v1019 = vsel %vm163, %v1013, %v1014
    %v1020 = vsel %vm163, %v1016, %v1013
    %v1021 = vrot.slane %v1007, 2
    %v1022 = vrot.slane %v1008, 2
    %v1023 = vrot.slane %v1009, 2
    %v1024 = vrot.slane %v1010, 2
    %v1025 = vsel %vm196, %v1023, %v1024
    %v1026 = vsel %vm196, %v1022, %v1023
    %v1027 = vsel %vm196, %v1021, %v1022
    %v1028 = vsel %vm196, %v1024, %v1021
    %1033 = vrot.lane.b32.xlu0 %v1019, 64
    %v1034 = vpop.permute.xlu0 %1033
    %1035 = vrot.lane.b32.xlu0 %v1018, 64
    %v1036 = vpop.permute.xlu0 %1035
    %1037 = vrot.lane.b32.xlu0 %v1017, 64
    %v1038 = vpop.permute.xlu0 %1037
    %1039 = vrot.lane.b32.xlu0 %v1020, 64
    %v1040 = vpop.permute.xlu0 %1039
    %v1045 = vsel %vm797, %v1007, %v1034
    %v1046 = vsel %vm797, %v1008, %v1036
    %v1047 = vsel %vm797, %v1009, %v1038
    %v1048 = vsel %vm797, %v1010, %v1040
    %v1049 = vld [vmem:[%s7] sm:$0xff]
    %v1050 = vld [vmem:[%s7 + $0x8] sm:$0xff]
    %v1051 = vld [vmem:[%s7 + $0x10] sm:$0xff]
    %v1052 = vld [vmem:[%s7 + $0x18] sm:$0xff]
    %v1053 = vld [vmem:[%s7 + $0x20] sm:$0xff]
    %v1054 = vld [vmem:[%s7 + $0x28] sm:$0xff]
    %v1055 = vld [vmem:[%s7 + $0x30] sm:$0xff]
    %v1056 = vld [vmem:[%s7 + $0x38] sm:$0xff]
    %v1057 = vld [vmem:[%s7 + $0x40] sm:$0xff]
    %v1058 = vld [vmem:[%s7 + $0x48] sm:$0xff]
    %v1059 = vld [vmem:[%s7 + $0x50] sm:$0xff]
    %v1060 = vld [vmem:[%s7 + $0x58] sm:$0xff]
    %v1061 = vld [vmem:[%s7 + $0x60] sm:$0xff]
    %v1062 = vld [vmem:[%s7 + $0x68] sm:$0xff]
    %v1063 = vld [vmem:[%s7 + $0x70] sm:$0xff]
    %v1064 = vld [vmem:[%s7 + $0x78] sm:$0xff]
    %v1065 = vld [vmem:[%s7 + $0x80] sm:$0xff]
    %v1066 = vld [vmem:[%s7 + $0x88] sm:$0xff]
    %v1067 = vld [vmem:[%s7 + $0x90] sm:$0xff]
    %v1068 = vld [vmem:[%s7 + $0x98] sm:$0xff]
    %v1069 = vld [vmem:[%s7 + $0xa0] sm:$0xff]
    %v1070 = vld [vmem:[%s7 + $0xa8] sm:$0xff]
    %v1071 = vld [vmem:[%s7 + $0xb0] sm:$0xff]
    %v1072 = vld [vmem:[%s7 + $0xb8] sm:$0xff]
    %v1074 = vsel %vm797, %v1027, 0
    %v1077 = vsel %vm797, %v1026, 0
    %v1080 = vsel %vm797, %v1025, 0
    %v1083 = vsel %vm797, %v1028, 0
    %1085 = vmatprep.subr.mxu0 0.0
    %1086 = vmatpush1.msra.mxu0 %v1049
    %1087 = vmatprep.subr.mxu0 0.0
    %1088 = vmatpush1.msra.mxu0 %v1050
    %1089 = vmatprep.subr.mxu0 0.0
    %1090 = vmatpush1.msra.mxu0 %v1051
    %1091 = vmatprep.subr.mxu0 0.0
    %1092 = vmatpush1.msra.mxu0 %v1052
    %1093 = vmatprep.subr.mxu0 0.0
    %1094 = vmatpush1.msra.mxu0 %v1053
    %1095 = vmatprep.subr.mxu0 0.0
    %1096 = vmatpush1.msra.mxu0 %v1054
    %1097 = vmatprep.subr.mxu0 0.0
    %1098 = vmatpush1.msra.mxu0 %v1055
    %1099 = vmatprep.subr.mxu0 0.0
    %1100 = vmatpush1.msra.mxu0 %v1056
    %1101 = vmatprep.subr.mxu0 0.0
    %1102 = vmatpush1.msra.mxu0 %v1057
    %1103 = vmatprep.subr.mxu0 0.0
    %1104 = vmatpush1.msra.mxu0 %v1058
    %1105 = vmatprep.subr.mxu0 0.0
    %1106 = vmatpush1.msra.mxu0 %v1059
    %1107 = vmatprep.subr.mxu0 0.0
    %1108 = vmatpush1.msra.mxu0 %v1060
    %1109 = vmatprep.subr.mxu0 0.0
    %1110 = vmatpush1.msra.mxu0 %v1061
    %1111 = vmatprep.subr.mxu0 0.0
    %1112 = vmatpush1.msra.mxu0 %v1062
    %1113 = vmatprep.subr.mxu0 0.0
    %1114 = vmatpush1.msra.mxu0 %v1063
    %1115 = vmatprep.subr.mxu0 0.0
    %1116 = vmatpush1.msra.mxu0 %v1064
    %1117 = vmatprep.subr.mxu0 0.0
    %1118 = vmatpush1.msra.mxu0 %v1065
    %1119 = vmatprep.subr.mxu0 0.0
    %1120 = vmatpush1.msra.mxu0 %v1066
    %1121 = vmatprep.subr.mxu0 0.0
    %1122 = vmatpush1.msra.mxu0 %v1067
    %1123 = vmatprep.subr.mxu0 0.0
    %1124 = vmatpush1.msra.mxu0 %v1068
    %1125 = vmatprep.subr.mxu0 0.0
    %1126 = vmatpush1.msra.mxu0 %v1069
    %1127 = vmatprep.subr.mxu0 0.0
    %1128 = vmatpush1.msra.mxu0 %v1070
    %1129 = vmatprep.subr.mxu0 0.0
    %1130 = vmatpush1.msra.mxu0 %v1071
    %1131 = vmatprep.subr.mxu0 0.0
    %1132 = vmatpush1.msra.mxu0 %v1072
    %1133 = vmatprep.subr.mxu0 0.0
    %1134 = vmatpush1.msra.mxu0 0.0
    %1135 = vmatprep.subr.mxu0 0.0
    %1136 = vmatpush1.msra.mxu0 0.0
    %1137 = vmatprep.subr.mxu0 0.0
    %1138 = vmatpush1.msra.mxu0 0.0
    %1139 = vmatprep.subr.mxu0 0.0
    %1140 = vmatpush1.msra.mxu0 0.0
    %1141 = vmatprep.subr.mxu0 0.0
    %1142 = vmatpush1.msra.mxu0 0.0
    %1143 = vmatprep.subr.mxu0 0.0
    %1144 = vmatpush1.msra.mxu0 0.0
    %1145 = vmatprep.subr.mxu0 0.0
    %1146 = vmatpush1.msra.mxu0 0.0
    %1147 = vmatprep.subr.mxu0 0.0
    %1148 = vmatpush1.msra.mxu0 0.0
    %1149 = vmatprep.mubr.f32.mxu0 %v1074
    %1150 = vmatmul.mubr.f32.gmra.mrb[0].mxu0 %v1045
    %v1151 = vpop.f32.mrb[0].mxu0
    %v1152 = vadd.f32 0.0, %v1151
    %v1153 = vpop.f32.mrb[0].mxu0
    %1154 = vmatprep.mubr.f32.mxu0 %v1077
    %1155 = vmatmul.mubr.f32.gmra.mrb[0].mxu0 %v1046
    %v1156 = vpop.f32.mrb[0].mxu0
    %v1157 = vadd.f32 0.0, %v1156
    %v1158 = vpop.f32.mrb[0].mxu0
    %1159 = vmatprep.mubr.f32.mxu0 %v1080
    %1160 = vmatmul.mubr.f32.gmra.mrb[0].mxu0 %v1047
    %v1161 = vpop.f32.mrb[0].mxu0
    %v1162 = vadd.f32 0.0, %v1161
    %v1163 = vpop.f32.mrb[0].mxu0
    %1164 = vmatprep.mubr.f32.mxu0 %v1083
    %1165 = vmatmul.mubr.f32.gmra.mrb[0].mxu0 %v1048
    %v1166 = vpop.f32.mrb[0].mxu0
    %v1167 = vadd.f32 0.0, %v1166
    %v1168 = vpop.f32.mrb[0].mxu0
    %1169 = vdwg.mxu0
    %v1171 = vlaneseq
    %v1172 = vshrl.u32 %v1171, 7
    %v1173 = vsub.s32 0, %v1172
    %v1174 = vrot.slane %v1011, %v1173
    %v1176 = vmul.f32 %v1152, %v1174
    %v1177 = vmul.f32 %v1157, %v1174
    %v1178 = vmul.f32 %v1162, %v1174
    %v1179 = vmul.f32 %v1167, %v1174
    %v1181 = vlaneseq
    %v1182 = vshrl.u32 %v1181, 7
    %v1183 = vsub.s32 0, %v1182
    %v1184 = vrot.slane %v1012, %v1183
    %v1186 = vadd.f32 %v1176, %v1184
    %v1187 = vadd.f32 %v1177, %v1184
    %v1188 = vadd.f32 %v1178, %v1184
    %v1189 = vadd.f32 %v1179, %v1184
    %v1190 = vmax.f32 %v1186, 0.0
    %v1191 = vmax.f32 %v1187, 0.0
    %v1192 = vmax.f32 %v1188, 0.0
    %v1193 = vmax.f32 %v1189, 0.0
    %1194 = vst [vmem:[#allocation7] sm:$0xff] %v1190
    %1195 = vst [vmem:[#allocation7 + $0x8] sm:$0xff] %v1191
    %1196 = vst [vmem:[#allocation7 + $0x10] sm:$0xff] %v1192
    %1197 = vst [vmem:[#allocation7 + $0x18] sm:$0xff] %v1193
    %v1198 = vld [vmem:[#allocation7] ss:$2 sm:$0xff]
    %s1199 = scalar_lea.vmem [#allocation7], 16
    %v1200 = vld [vmem:[%s1199] ss:$2 sm:$0xff]
    %s1201 = scalar_lea.vmem [#allocation7], 1
    %v1202 = vld [vmem:[%s1201] ss:$2 sm:$0xff]
    %s1203 = scalar_lea.vmem [#allocation7], 17
    %v1204 = vld [vmem:[%s1203] ss:$2 sm:$0xff]
    %v1205 = vmax.f32 %v1198, %v1202
    %v1206 = vmax.f32 %v1200, %v1204
    %1207 = vst [vmem:[#allocation2] sm:$0x1] %v1205
    %v1210 = vunpack.c.l.s4 1983009808
    %v1211 = vunpack.c.0.s8 %v1210
    %v1212 = vlaneseq
    %v1213 = vshrl.u32 %v1212, 7
    %v1214 = vsub.s32 %v1211, %v1213
    %v1215 = vrot.slane %v1205, %v1214
    %v1216 = vrot.slane %v1215, 7
    %v1217 = vrot.slane %v1216, 2
    %1219 = vst [vmem:[#allocation2 + $0x2] sm:$0x1] %v1217
    %v1220 = vcombine.high %v1215, %v1215
    %1222 = vst [vmem:[#allocation2 + $0x4] sm:$0x1] %v1220
    %v1223 = vrot.slane %v1220, 7
    %v1224 = vrot.slane %v1223, 2
    %1226 = vst [vmem:[#allocation2 + $0x6] sm:$0x1] %v1224
    %v1227 = vcombine.high %v1205, %v1205
    %v1229 = vunpack.c.l.s4 1983009808
    %v1230 = vunpack.c.0.s8 %v1229
    %v1231 = vlaneseq
    %v1232 = vshrl.u32 %v1231, 7
    %v1233 = vsub.s32 %v1230, %v1232
    %v1234 = vrot.slane %v1227, %v1233
    %1236 = vst [vmem:[#allocation2 + $0x8] sm:$0x1] %v1234
    %v1237 = vrot.slane %v1234, 7
    %v1238 = vrot.slane %v1237, 2
    %1240 = vst [vmem:[#allocation2 + $0xa] sm:$0x1] %v1238
    %1241 = vst [vmem:[#allocation2 + $0x1] sm:$0x1] %v1206
    %v1244 = vunpack.c.l.s4 1983009808
    %v1245 = vunpack.c.0.s8 %v1244
    %v1246 = vlaneseq
    %v1247 = vshrl.u32 %v1246, 7
    %v1248 = vsub.s32 %v1245, %v1247
    %v1249 = vrot.slane %v1206, %v1248
    %v1250 = vrot.slane %v1249, 7
    %v1251 = vrot.slane %v1250, 2
    %1253 = vst [vmem:[#allocation2 + $0x3] sm:$0x1] %v1251
    %v1254 = vcombine.high %v1249, %v1249
    %1256 = vst [vmem:[#allocation2 + $0x5] sm:$0x1] %v1254
    %v1257 = vrot.slane %v1254, 7
    %v1258 = vrot.slane %v1257, 2
    %1260 = vst [vmem:[#allocation2 + $0x7] sm:$0x1] %v1258
    %v1261 = vcombine.high %v1206, %v1206
    %v1263 = vunpack.c.l.s4 1983009808
    %v1264 = vunpack.c.0.s8 %v1263
    %v1265 = vlaneseq
    %v1266 = vshrl.u32 %v1265, 7
    %v1267 = vsub.s32 %v1264, %v1266
    %v1268 = vrot.slane %v1261, %v1267
    %1270 = vst [vmem:[#allocation2 + $0x9] sm:$0x1] %v1268
    %v1271 = vrot.slane %v1268, 7
    %v1272 = vrot.slane %v1271, 2
    %1274 = vst [vmem:[#allocation2 + $0xb] sm:$0x1] %v1272
    %s1275 = smul.u32 4, 96
    %s1276 = smul.u32 %s1275, 4
    %s1277 = sshll.u32 %s1276, 4
    %1278 = dma.done [#allocation8], %s1277
    %v1279 = vld [vmem:[#allocation2] sm:$0xff]
    %v1280 = vld [vmem:[#allocation2 + $0x8] sm:$0xf]
    %v1283 = vcombine.high %v1279, %v1279
    %v1285 = vunpack.c.l.s4 1983009808
    %v1286 = vunpack.c.0.s8 %v1285
    %v1287 = vlaneseq
    %v1288 = vshrl.u32 %v1287, 7
    %v1289 = vsub.s32 %v1286, %v1288
    %v1290 = vrot.slane %v1279, %v1289
    %v1292 = vunpack.c.l.s4 1983009808
    %v1293 = vunpack.c.0.s8 %v1292
    %v1294 = vlaneseq
    %v1295 = vshrl.u32 %v1294, 7
    %v1296 = vsub.s32 %v1293, %v1295
    %v1297 = vrot.slane %v1283, %v1296
    %v1298 = vcombine.high %v1290, %v1290
    %v1299 = vcombine.high %v1297, %v1297
    %v1301 = vunpack.c.l.s4 1983009808
    %v1302 = vunpack.c.0.s8 %v1301
    %v1303 = vlaneseq
    %v1304 = vshrl.u32 %v1303, 7
    %v1305 = vsub.s32 %v1302, %v1304
    %v1306 = vrot.slane %v1280, %v1305
    %v1307 = vcombine.high %v1306, %v1306
    %v1314 = vpack.c.bf16 %v1290, %v1290
    %v1315 = vpack.c.bf16 %v1298, %v1298
    %v1316 = vpack.c.bf16 %v1297, %v1297
    %v1317 = vpack.c.bf16 %v1299, %v1299
    %v1318 = vpack.c.bf16 %v1306, %v1306
    %v1319 = vpack.c.bf16 %v1307, %v1307
    %v1320 = vld [vmem:[#allocation3] sm:$0xff]
    %v1321 = vld [vmem:[#allocation3 + $0x8] sm:$0xff]
    %v1322 = vld [vmem:[#allocation3 + $0x10] sm:$0xff]
    %v1323 = vld [vmem:[#allocation3 + $0x18] sm:$0xff]
    %v1324 = vld [vmem:[#allocation3 + $0x20] sm:$0xff]
    %v1325 = vld [vmem:[#allocation3 + $0x28] sm:$0xff]
    %v1326 = vld [vmem:[#allocation3 + $0x30] sm:$0xff]
    %v1327 = vld [vmem:[#allocation3 + $0x38] sm:$0xff]
    %v1328 = vld [vmem:[#allocation3 + $0x40] sm:$0xff]
    %v1329 = vld [vmem:[#allocation3 + $0x48] sm:$0xff]
    %v1330 = vld [vmem:[#allocation3 + $0x50] sm:$0xff]
    %v1331 = vld [vmem:[#allocation3 + $0x58] sm:$0xff]
    %v1332 = vld [vmem:[#allocation3 + $0x60] sm:$0xff]
    %v1333 = vld [vmem:[#allocation3 + $0x68] sm:$0xff]
    %v1334 = vld [vmem:[#allocation3 + $0x70] sm:$0xff]
    %v1335 = vld [vmem:[#allocation3 + $0x78] sm:$0xff]
    %v1336 = vld [vmem:[#allocation3 + $0x80] sm:$0xff]
    %v1337 = vld [vmem:[#allocation3 + $0x88] sm:$0xff]
    %v1338 = vld [vmem:[#allocation3 + $0x90] sm:$0xff]
    %v1339 = vld [vmem:[#allocation3 + $0x98] sm:$0xff]
    %v1340 = vld [vmem:[#allocation3 + $0xa0] sm:$0xff]
    %v1341 = vld [vmem:[#allocation3 + $0xa8] sm:$0xff]
    %v1342 = vld [vmem:[#allocation3 + $0xb0] sm:$0xff]
    %v1343 = vld [vmem:[#allocation3 + $0xb8] sm:$0xff]
    %v1344 = vld [vmem:[#allocation3 + $0xc0] sm:$0xff]
    %v1345 = vld [vmem:[#allocation3 + $0xc8] sm:$0xff]
    %v1346 = vld [vmem:[#allocation3 + $0xd0] sm:$0xff]
    %v1347 = vld [vmem:[#allocation3 + $0xd8] sm:$0xff]
    %v1348 = vld [vmem:[#allocation3 + $0xe0] sm:$0xff]
    %v1349 = vld [vmem:[#allocation3 + $0xe8] sm:$0xff]
    %v1350 = vld [vmem:[#allocation3 + $0xf0] sm:$0xff]
    %v1351 = vld [vmem:[#allocation3 + $0xf8] sm:$0xff]
    %v1352 = vld [vmem:[#allocation3 + $0x100] sm:$0xff]
    %v1353 = vld [vmem:[#allocation3 + $0x108] sm:$0xff]
    %v1354 = vld [vmem:[#allocation3 + $0x110] sm:$0xff]
    %v1355 = vld [vmem:[#allocation3 + $0x118] sm:$0xff]
    %v1356 = vld [vmem:[#allocation3 + $0x120] sm:$0xff]
    %v1357 = vld [vmem:[#allocation3 + $0x128] sm:$0xff]
    %v1358 = vld [vmem:[#allocation3 + $0x130] sm:$0xff]
    %v1359 = vld [vmem:[#allocation3 + $0x138] sm:$0xff]
    %v1360 = vld [vmem:[#allocation3 + $0x140] sm:$0xff]
    %v1361 = vld [vmem:[#allocation3 + $0x148] sm:$0xff]
    %v1362 = vld [vmem:[#allocation3 + $0x150] sm:$0xff]
    %v1363 = vld [vmem:[#allocation3 + $0x158] sm:$0xff]
    %v1364 = vld [vmem:[#allocation3 + $0x160] sm:$0xff]
    %v1365 = vld [vmem:[#allocation3 + $0x168] sm:$0xff]
    %v1366 = vld [vmem:[#allocation3 + $0x170] sm:$0xff]
    %v1367 = vld [vmem:[#allocation3 + $0x178] sm:$0xff]
    %v1368 = vld [vmem:[#allocation3 + $0x180] sm:$0xff]
    %v1369 = vld [vmem:[#allocation3 + $0x188] sm:$0xff]
    %v1370 = vld [vmem:[#allocation3 + $0x190] sm:$0xff]
    %v1371 = vld [vmem:[#allocation3 + $0x198] sm:$0xff]
    %v1372 = vld [vmem:[#allocation3 + $0x1a0] sm:$0xff]
    %v1373 = vld [vmem:[#allocation3 + $0x1a8] sm:$0xff]
    %v1374 = vld [vmem:[#allocation3 + $0x1b0] sm:$0xff]
    %v1375 = vld [vmem:[#allocation3 + $0x1b8] sm:$0xff]
    %v1376 = vld [vmem:[#allocation3 + $0x1c0] sm:$0xff]
    %v1377 = vld [vmem:[#allocation3 + $0x1c8] sm:$0xff]
    %v1378 = vld [vmem:[#allocation3 + $0x1d0] sm:$0xff]
    %v1379 = vld [vmem:[#allocation3 + $0x1d8] sm:$0xff]
    %v1380 = vld [vmem:[#allocation3 + $0x1e0] sm:$0xff]
    %v1381 = vld [vmem:[#allocation3 + $0x1e8] sm:$0xff]
    %v1382 = vld [vmem:[#allocation3 + $0x1f0] sm:$0xff]
    %v1383 = vld [vmem:[#allocation3 + $0x1f8] sm:$0xff]
    %v1384 = vld [vmem:[#allocation3 + $0x200] sm:$0xff]
    %v1385 = vld [vmem:[#allocation3 + $0x208] sm:$0xff]
    %v1386 = vld [vmem:[#allocation3 + $0x210] sm:$0xff]
    %v1387 = vld [vmem:[#allocation3 + $0x218] sm:$0xff]
    %v1388 = vld [vmem:[#allocation3 + $0x220] sm:$0xff]
    %v1389 = vld [vmem:[#allocation3 + $0x228] sm:$0xff]
    %v1390 = vld [vmem:[#allocation3 + $0x230] sm:$0xff]
    %v1391 = vld [vmem:[#allocation3 + $0x238] sm:$0xff]
    %v1392 = vld [vmem:[#allocation3 + $0x240] sm:$0xff]
    %v1393 = vld [vmem:[#allocation3 + $0x248] sm:$0xff]
    %v1394 = vld [vmem:[#allocation3 + $0x250] sm:$0xff]
    %v1395 = vld [vmem:[#allocation3 + $0x258] sm:$0xff]
    %v1396 = vld [vmem:[#allocation3 + $0x260] sm:$0xff]
    %v1397 = vld [vmem:[#allocation3 + $0x268] sm:$0xff]
    %v1398 = vld [vmem:[#allocation3 + $0x270] sm:$0xff]
    %v1399 = vld [vmem:[#allocation3 + $0x278] sm:$0xff]
    %v1400 = vld [vmem:[#allocation3 + $0x280] sm:$0xff]
    %v1401 = vld [vmem:[#allocation3 + $0x288] sm:$0xff]
    %v1402 = vld [vmem:[#allocation3 + $0x290] sm:$0xff]
    %v1403 = vld [vmem:[#allocation3 + $0x298] sm:$0xff]
    %v1404 = vld [vmem:[#allocation3 + $0x2a0] sm:$0xff]
    %v1405 = vld [vmem:[#allocation3 + $0x2a8] sm:$0xff]
    %v1406 = vld [vmem:[#allocation3 + $0x2b0] sm:$0xff]
    %v1407 = vld [vmem:[#allocation3 + $0x2b8] sm:$0xff]
    %v1408 = vld [vmem:[#allocation3 + $0x2c0] sm:$0xff]
    %v1409 = vld [vmem:[#allocation3 + $0x2c8] sm:$0xff]
    %v1410 = vld [vmem:[#allocation3 + $0x2d0] sm:$0xff]
    %v1411 = vld [vmem:[#allocation3 + $0x2d8] sm:$0xff]
    %v1412 = vld [vmem:[#allocation3 + $0x2e0] sm:$0xff]
    %v1413 = vld [vmem:[#allocation3 + $0x2e8] sm:$0xff]
    %v1414 = vld [vmem:[#allocation3 + $0x2f0] sm:$0xff]
    %v1415 = vld [vmem:[#allocation3 + $0x2f8] sm:$0xff]
    %v1416 = vld [vmem:[#allocation3 + $0x300] sm:$0xff]
    %v1417 = vld [vmem:[#allocation3 + $0x308] sm:$0xff]
    %v1418 = vld [vmem:[#allocation3 + $0x310] sm:$0xff]
    %v1419 = vld [vmem:[#allocation3 + $0x318] sm:$0xff]
    %v1420 = vld [vmem:[#allocation3 + $0x320] sm:$0xff]
    %v1421 = vld [vmem:[#allocation3 + $0x328] sm:$0xff]
    %v1422 = vld [vmem:[#allocation3 + $0x330] sm:$0xff]
    %v1423 = vld [vmem:[#allocation3 + $0x338] sm:$0xff]
    %v1424 = vld [vmem:[#allocation3 + $0x340] sm:$0xff]
    %v1425 = vld [vmem:[#allocation3 + $0x348] sm:$0xff]
    %v1426 = vld [vmem:[#allocation3 + $0x350] sm:$0xff]
    %v1427 = vld [vmem:[#allocation3 + $0x358] sm:$0xff]
    %v1428 = vld [vmem:[#allocation3 + $0x360] sm:$0xff]
    %v1429 = vld [vmem:[#allocation3 + $0x368] sm:$0xff]
    %v1430 = vld [vmem:[#allocation3 + $0x370] sm:$0xff]
    %v1431 = vld [vmem:[#allocation3 + $0x378] sm:$0xff]
    %v1432 = vld [vmem:[#allocation3 + $0x380] sm:$0xff]
    %v1433 = vld [vmem:[#allocation3 + $0x388] sm:$0xff]
    %v1434 = vld [vmem:[#allocation3 + $0x390] sm:$0xff]
    %v1435 = vld [vmem:[#allocation3 + $0x398] sm:$0xff]
    %v1436 = vld [vmem:[#allocation3 + $0x3a0] sm:$0xff]
    %v1437 = vld [vmem:[#allocation3 + $0x3a8] sm:$0xff]
    %v1438 = vld [vmem:[#allocation3 + $0x3b0] sm:$0xff]
    %v1439 = vld [vmem:[#allocation3 + $0x3b8] sm:$0xff]
    %v1440 = vld [vmem:[#allocation3 + $0x3c0] sm:$0xff]
    %v1441 = vld [vmem:[#allocation3 + $0x3c8] sm:$0xff]
    %v1442 = vld [vmem:[#allocation3 + $0x3d0] sm:$0xff]
    %v1443 = vld [vmem:[#allocation3 + $0x3d8] sm:$0xff]
    %v1444 = vld [vmem:[#allocation3 + $0x3e0] sm:$0xff]
    %v1445 = vld [vmem:[#allocation3 + $0x3e8] sm:$0xff]
    %v1446 = vld [vmem:[#allocation3 + $0x3f0] sm:$0xff]
    %v1447 = vld [vmem:[#allocation3 + $0x3f8] sm:$0xff]
    %v1448 = vld [vmem:[#allocation3 + $0x400] sm:$0xff]
    %v1449 = vld [vmem:[#allocation3 + $0x408] sm:$0xff]
    %v1450 = vld [vmem:[#allocation3 + $0x410] sm:$0xff]
    %v1451 = vld [vmem:[#allocation3 + $0x418] sm:$0xff]
    %v1452 = vld [vmem:[#allocation3 + $0x420] sm:$0xff]
    %v1453 = vld [vmem:[#allocation3 + $0x428] sm:$0xff]
    %v1454 = vld [vmem:[#allocation3 + $0x430] sm:$0xff]
    %v1455 = vld [vmem:[#allocation3 + $0x438] sm:$0xff]
    %v1456 = vld [vmem:[#allocation3 + $0x440] sm:$0xff]
    %v1457 = vld [vmem:[#allocation3 + $0x448] sm:$0xff]
    %v1458 = vld [vmem:[#allocation3 + $0x450] sm:$0xff]
    %v1459 = vld [vmem:[#allocation3 + $0x458] sm:$0xff]
    %v1460 = vld [vmem:[#allocation3 + $0x460] sm:$0xff]
    %v1461 = vld [vmem:[#allocation3 + $0x468] sm:$0xff]
    %v1462 = vld [vmem:[#allocation3 + $0x470] sm:$0xff]
    %v1463 = vld [vmem:[#allocation3 + $0x478] sm:$0xff]
    %v1464 = vld [vmem:[#allocation3 + $0x480] sm:$0xff]
    %v1465 = vld [vmem:[#allocation3 + $0x488] sm:$0xff]
    %v1466 = vld [vmem:[#allocation3 + $0x490] sm:$0xff]
    %v1467 = vld [vmem:[#allocation3 + $0x498] sm:$0xff]
    %v1468 = vld [vmem:[#allocation3 + $0x4a0] sm:$0xff]
    %v1469 = vld [vmem:[#allocation3 + $0x4a8] sm:$0xff]
    %v1470 = vld [vmem:[#allocation3 + $0x4b0] sm:$0xff]
    %v1471 = vld [vmem:[#allocation3 + $0x4b8] sm:$0xff]
    %v1472 = vld [vmem:[#allocation3 + $0x4c0] sm:$0xff]
    %v1473 = vld [vmem:[#allocation3 + $0x4c8] sm:$0xff]
    %v1474 = vld [vmem:[#allocation3 + $0x4d0] sm:$0xff]
    %v1475 = vld [vmem:[#allocation3 + $0x4d8] sm:$0xff]
    %v1476 = vld [vmem:[#allocation3 + $0x4e0] sm:$0xff]
    %v1477 = vld [vmem:[#allocation3 + $0x4e8] sm:$0xff]
    %v1478 = vld [vmem:[#allocation3 + $0x4f0] sm:$0xff]
    %v1479 = vld [vmem:[#allocation3 + $0x4f8] sm:$0xff]
    %v1480 = vld [vmem:[#allocation3 + $0x500] sm:$0xff]
    %v1481 = vld [vmem:[#allocation3 + $0x508] sm:$0xff]
    %v1482 = vld [vmem:[#allocation3 + $0x510] sm:$0xff]
    %v1483 = vld [vmem:[#allocation3 + $0x518] sm:$0xff]
    %v1484 = vld [vmem:[#allocation3 + $0x520] sm:$0xff]
    %v1485 = vld [vmem:[#allocation3 + $0x528] sm:$0xff]
    %v1486 = vld [vmem:[#allocation3 + $0x530] sm:$0xff]
    %v1487 = vld [vmem:[#allocation3 + $0x538] sm:$0xff]
    %v1488 = vld [vmem:[#allocation3 + $0x540] sm:$0xff]
    %v1489 = vld [vmem:[#allocation3 + $0x548] sm:$0xff]
    %v1490 = vld [vmem:[#allocation3 + $0x550] sm:$0xff]
    %v1491 = vld [vmem:[#allocation3 + $0x558] sm:$0xff]
    %v1492 = vld [vmem:[#allocation3 + $0x560] sm:$0xff]
    %v1493 = vld [vmem:[#allocation3 + $0x568] sm:$0xff]
    %v1494 = vld [vmem:[#allocation3 + $0x570] sm:$0xff]
    %v1495 = vld [vmem:[#allocation3 + $0x578] sm:$0xff]
    %v1496 = vld [vmem:[#allocation3 + $0x580] sm:$0xff]
    %v1497 = vld [vmem:[#allocation3 + $0x588] sm:$0xff]
    %v1498 = vld [vmem:[#allocation3 + $0x590] sm:$0xff]
    %v1499 = vld [vmem:[#allocation3 + $0x598] sm:$0xff]
    %v1500 = vld [vmem:[#allocation3 + $0x5a0] sm:$0xff]
    %v1501 = vld [vmem:[#allocation3 + $0x5a8] sm:$0xff]
    %v1502 = vld [vmem:[#allocation3 + $0x5b0] sm:$0xff]
    %v1503 = vld [vmem:[#allocation3 + $0x5b8] sm:$0xff]
    %v1504 = vld [vmem:[#allocation3 + $0x5c0] sm:$0xff]
    %v1505 = vld [vmem:[#allocation3 + $0x5c8] sm:$0xff]
    %v1506 = vld [vmem:[#allocation3 + $0x5d0] sm:$0xff]
    %v1507 = vld [vmem:[#allocation3 + $0x5d8] sm:$0xff]
    %v1508 = vld [vmem:[#allocation3 + $0x5e0] sm:$0xff]
    %v1509 = vld [vmem:[#allocation3 + $0x5e8] sm:$0xff]
    %v1510 = vld [vmem:[#allocation3 + $0x5f0] sm:$0xff]
    %v1511 = vld [vmem:[#allocation3 + $0x5f8] sm:$0xff]
    %1512 = vmatprep.subr.bf16.mxu0 %v1321
    %1513 = vmatpush1.bf16.msra.mxu0 %v1320
    %1514 = vmatprep.subr.bf16.mxu0 %v1325
    %1515 = vmatpush1.bf16.msra.mxu0 %v1324
    %1516 = vmatprep.subr.bf16.mxu0 %v1329
    %1517 = vmatpush1.bf16.msra.mxu0 %v1328
    %1518 = vmatprep.subr.bf16.mxu0 %v1333
    %1519 = vmatpush1.bf16.msra.mxu0 %v1332
    %1520 = vmatprep.subr.bf16.mxu0 %v1337
    %1521 = vmatpush1.bf16.msra.mxu0 %v1336
    %1522 = vmatprep.subr.bf16.mxu0 %v1341
    %1523 = vmatpush1.bf16.msra.mxu0 %v1340
    %1524 = vmatprep.subr.bf16.mxu0 %v1345
    %1525 = vmatpush1.bf16.msra.mxu0 %v1344
    %1526 = vmatprep.subr.bf16.mxu0 %v1349
    %1527 = vmatpush1.bf16.msra.mxu0 %v1348
    %1528 = vmatprep.subr.bf16.mxu0 %v1353
    %1529 = vmatpush1.bf16.msra.mxu0 %v1352
    %1530 = vmatprep.subr.bf16.mxu0 %v1357
    %1531 = vmatpush1.bf16.msra.mxu0 %v1356
    %1532 = vmatprep.subr.bf16.mxu0 %v1361
    %1533 = vmatpush1.bf16.msra.mxu0 %v1360
    %1534 = vmatprep.subr.bf16.mxu0 %v1365
    %1535 = vmatpush1.bf16.msra.mxu0 %v1364
    %1536 = vmatprep.subr.bf16.mxu0 %v1369
    %1537 = vmatpush1.bf16.msra.mxu0 %v1368
    %1538 = vmatprep.subr.bf16.mxu0 %v1373
    %1539 = vmatpush1.bf16.msra.mxu0 %v1372
    %1540 = vmatprep.subr.bf16.mxu0 %v1377
    %1541 = vmatpush1.bf16.msra.mxu0 %v1376
    %1542 = vmatprep.subr.bf16.mxu0 %v1381
    %1543 = vmatpush1.bf16.msra.mxu0 %v1380
    %1544 = vmatprep.mubr.bf16.mxu0 %v1315
    %1545 = vmatmul.mubr.bf16.gmra.mrb[0].mxu0 %v1314
    %v1546 = vpop.f32.mrb[0].mxu0
    %v1547 = vadd.f32 0.0, %v1546
    %v1548 = vpop.f32.mrb[0].mxu0
    %v1549 = vadd.f32 0.0, %v1548
    %v1550 = vpop.f32.mrb[0].mxu0
    %v1551 = vpop.f32.mrb[0].mxu0
    %1552 = vdwg.mxu0
    %1553 = vmatprep.subr.bf16.mxu0 %v1385
    %1554 = vmatpush1.bf16.msra.mxu0 %v1384
    %1555 = vmatprep.subr.bf16.mxu0 %v1389
    %1556 = vmatpush1.bf16.msra.mxu0 %v1388
    %1557 = vmatprep.subr.bf16.mxu0 %v1393
    %1558 = vmatpush1.bf16.msra.mxu0 %v1392
    %1559 = vmatprep.subr.bf16.mxu0 %v1397
    %1560 = vmatpush1.bf16.msra.mxu0 %v1396
    %1561 = vmatprep.subr.bf16.mxu0 %v1401
    %1562 = vmatpush1.bf16.msra.mxu0 %v1400
    %1563 = vmatprep.subr.bf16.mxu0 %v1405
    %1564 = vmatpush1.bf16.msra.mxu0 %v1404
    %1565 = vmatprep.subr.bf16.mxu0 %v1409
    %1566 = vmatpush1.bf16.msra.mxu0 %v1408
    %1567 = vmatprep.subr.bf16.mxu0 %v1413
    %1568 = vmatpush1.bf16.msra.mxu0 %v1412
    %1569 = vmatprep.subr.bf16.mxu0 %v1417
    %1570 = vmatpush1.bf16.msra.mxu0 %v1416
    %1571 = vmatprep.subr.bf16.mxu0 %v1421
    %1572 = vmatpush1.bf16.msra.mxu0 %v1420
    %1573 = vmatprep.subr.bf16.mxu0 %v1425
    %1574 = vmatpush1.bf16.msra.mxu0 %v1424
    %1575 = vmatprep.subr.bf16.mxu0 %v1429
    %1576 = vmatpush1.bf16.msra.mxu0 %v1428
    %1577 = vmatprep.subr.bf16.mxu0 %v1433
    %1578 = vmatpush1.bf16.msra.mxu0 %v1432
    %1579 = vmatprep.subr.bf16.mxu0 %v1437
    %1580 = vmatpush1.bf16.msra.mxu0 %v1436
    %1581 = vmatprep.subr.bf16.mxu0 %v1441
    %1582 = vmatpush1.bf16.msra.mxu0 %v1440
    %1583 = vmatprep.subr.bf16.mxu0 %v1445
    %1584 = vmatpush1.bf16.msra.mxu0 %v1444
    %1585 = vmatprep.mubr.bf16.mxu0 %v1317
    %1586 = vmatmul.mubr.bf16.gmra.mrb[0].mxu0 %v1316
    %v1587 = vpop.f32.mrb[0].mxu0
    %v1588 = vadd.f32 %v1547, %v1587
    %v1589 = vpop.f32.mrb[0].mxu0
    %v1590 = vadd.f32 %v1549, %v1589
    %v1591 = vpop.f32.mrb[0].mxu0
    %v1592 = vpop.f32.mrb[0].mxu0
    %1593 = vdwg.mxu0
    %1594 = vmatprep.subr.bf16.mxu0 %v1449
    %1595 = vmatpush1.bf16.msra.mxu0 %v1448
    %1596 = vmatprep.subr.bf16.mxu0 %v1453
    %1597 = vmatpush1.bf16.msra.mxu0 %v1452
    %1598 = vmatprep.subr.bf16.mxu0 %v1457
    %1599 = vmatpush1.bf16.msra.mxu0 %v1456
    %1600 = vmatprep.subr.bf16.mxu0 %v1461
    %1601 = vmatpush1.bf16.msra.mxu0 %v1460
    %1602 = vmatprep.subr.bf16.mxu0 %v1465
    %1603 = vmatpush1.bf16.msra.mxu0 %v1464
    %1604 = vmatprep.subr.bf16.mxu0 %v1469
    %1605 = vmatpush1.bf16.msra.mxu0 %v1468
    %1606 = vmatprep.subr.bf16.mxu0 %v1473
    %1607 = vmatpush1.bf16.msra.mxu0 %v1472
    %1608 = vmatprep.subr.bf16.mxu0 %v1477
    %1609 = vmatpush1.bf16.msra.mxu0 %v1476
    %1610 = vmatprep.subr.bf16.mxu0 %v1481
    %1611 = vmatpush1.bf16.msra.mxu0 %v1480
    %1612 = vmatprep.subr.bf16.mxu0 %v1485
    %1613 = vmatpush1.bf16.msra.mxu0 %v1484
    %1614 = vmatprep.subr.bf16.mxu0 %v1489
    %1615 = vmatpush1.bf16.msra.mxu0 %v1488
    %1616 = vmatprep.subr.bf16.mxu0 %v1493
    %1617 = vmatpush1.bf16.msra.mxu0 %v1492
    %1618 = vmatprep.subr.bf16.mxu0 %v1497
    %1619 = vmatpush1.bf16.msra.mxu0 %v1496
    %1620 = vmatprep.subr.bf16.mxu0 %v1501
    %1621 = vmatpush1.bf16.msra.mxu0 %v1500
    %1622 = vmatprep.subr.bf16.mxu0 %v1505
    %1623 = vmatpush1.bf16.msra.mxu0 %v1504
    %1624 = vmatprep.subr.bf16.mxu0 %v1509
    %1625 = vmatpush1.bf16.msra.mxu0 %v1508
    %1626 = vmatprep.mubr.bf16.mxu0 %v1319
    %1627 = vmatmul.mubr.bf16.gmra.mrb[0].mxu0 %v1318
    %v1628 = vpop.f32.mrb[0].mxu0
    %v1629 = vadd.f32 %v1588, %v1628
    %v1630 = vpop.f32.mrb[0].mxu0
    %v1631 = vadd.f32 %v1590, %v1630
    %v1632 = vpop.f32.mrb[0].mxu0
    %v1633 = vpop.f32.mrb[0].mxu0
    %1634 = vdwg.mxu0
    %1635 = vmatprep.subr.bf16.mxu0 %v1323
    %1636 = vmatpush1.bf16.msra.mxu0 %v1322
    %1637 = vmatprep.subr.bf16.mxu0 %v1327
    %1638 = vmatpush1.bf16.msra.mxu0 %v1326
    %1639 = vmatprep.subr.bf16.mxu0 %v1331
    %1640 = vmatpush1.bf16.msra.mxu0 %v1330
    %1641 = vmatprep.subr.bf16.mxu0 %v1335
    %1642 = vmatpush1.bf16.msra.mxu0 %v1334
    %1643 = vmatprep.subr.bf16.mxu0 %v1339
    %1644 = vmatpush1.bf16.msra.mxu0 %v1338
    %1645 = vmatprep.subr.bf16.mxu0 %v1343
    %1646 = vmatpush1.bf16.msra.mxu0 %v1342
    %1647 = vmatprep.subr.bf16.mxu0 %v1347
    %1648 = vmatpush1.bf16.msra.mxu0 %v1346
    %1649 = vmatprep.subr.bf16.mxu0 %v1351
    %1650 = vmatpush1.bf16.msra.mxu0 %v1350
    %1651 = vmatprep.subr.bf16.mxu0 %v1355
    %1652 = vmatpush1.bf16.msra.mxu0 %v1354
    %1653 = vmatprep.subr.bf16.mxu0 %v1359
    %1654 = vmatpush1.bf16.msra.mxu0 %v1358
    %1655 = vmatprep.subr.bf16.mxu0 %v1363
    %1656 = vmatpush1.bf16.msra.mxu0 %v1362
    %1657 = vmatprep.subr.bf16.mxu0 %v1367
    %1658 = vmatpush1.bf16.msra.mxu0 %v1366
    %1659 = vmatprep.subr.bf16.mxu0 %v1371
    %1660 = vmatpush1.bf16.msra.mxu0 %v1370
    %1661 = vmatprep.subr.bf16.mxu0 %v1375
    %1662 = vmatpush1.bf16.msra.mxu0 %v1374
    %1663 = vmatprep.subr.bf16.mxu0 %v1379
    %1664 = vmatpush1.bf16.msra.mxu0 %v1378
    %1665 = vmatprep.subr.bf16.mxu0 %v1383
    %1666 = vmatpush1.bf16.msra.mxu0 %v1382
    %1667 = vmatprep.mubr.bf16.mxu0 %v1315
    %1668 = vmatmul.mubr.bf16.gmra.mrb[0].mxu0 %v1314
    %v1669 = vpop.f32.mrb[0].mxu0
    %v1670 = vadd.f32 0.0, %v1669
    %v1671 = vpop.f32.mrb[0].mxu0
    %v1672 = vadd.f32 0.0, %v1671
    %v1673 = vpop.f32.mrb[0].mxu0
    %v1674 = vpop.f32.mrb[0].mxu0
    %1675 = vdwg.mxu0
    %1676 = vmatprep.subr.bf16.mxu0 %v1387
    %1677 = vmatpush1.bf16.msra.mxu0 %v1386
    %1678 = vmatprep.subr.bf16.mxu0 %v1391
    %1679 = vmatpush1.bf16.msra.mxu0 %v1390
    %1680 = vmatprep.subr.bf16.mxu0 %v1395
    %1681 = vmatpush1.bf16.msra.mxu0 %v1394
    %1682 = vmatprep.subr.bf16.mxu0 %v1399
    %1683 = vmatpush1.bf16.msra.mxu0 %v1398
    %1684 = vmatprep.subr.bf16.mxu0 %v1403
    %1685 = vmatpush1.bf16.msra.mxu0 %v1402
    %1686 = vmatprep.subr.bf16.mxu0 %v1407
    %1687 = vmatpush1.bf16.msra.mxu0 %v1406
    %1688 = vmatprep.subr.bf16.mxu0 %v1411
    %1689 = vmatpush1.bf16.msra.mxu0 %v1410
    %1690 = vmatprep.subr.bf16.mxu0 %v1415
    %1691 = vmatpush1.bf16.msra.mxu0 %v1414
    %1692 = vmatprep.subr.bf16.mxu0 %v1419
    %1693 = vmatpush1.bf16.msra.mxu0 %v1418
    %1694 = vmatprep.subr.bf16.mxu0 %v1423
    %1695 = vmatpush1.bf16.msra.mxu0 %v1422
    %1696 = vmatprep.subr.bf16.mxu0 %v1427
    %1697 = vmatpush1.bf16.msra.mxu0 %v1426
    %1698 = vmatprep.subr.bf16.mxu0 %v1431
    %1699 = vmatpush1.bf16.msra.mxu0 %v1430
    %1700 = vmatprep.subr.bf16.mxu0 %v1435
    %1701 = vmatpush1.bf16.msra.mxu0 %v1434
    %1702 = vmatprep.subr.bf16.mxu0 %v1439
    %1703 = vmatpush1.bf16.msra.mxu0 %v1438
    %1704 = vmatprep.subr.bf16.mxu0 %v1443
    %1705 = vmatpush1.bf16.msra.mxu0 %v1442
    %1706 = vmatprep.subr.bf16.mxu0 %v1447
    %1707 = vmatpush1.bf16.msra.mxu0 %v1446
    %1708 = vmatprep.mubr.bf16.mxu0 %v1317
    %1709 = vmatmul.mubr.bf16.gmra.mrb[0].mxu0 %v1316
    %v1710 = vpop.f32.mrb[0].mxu0
    %v1711 = vadd.f32 %v1670, %v1710
    %v1712 = vpop.f32.mrb[0].mxu0
    %v1713 = vadd.f32 %v1672, %v1712
    %v1714 = vpop.f32.mrb[0].mxu0
    %v1715 = vpop.f32.mrb[0].mxu0
    %1716 = vdwg.mxu0
    %1717 = vmatprep.subr.bf16.mxu0 %v1451
    %1718 = vmatpush1.bf16.msra.mxu0 %v1450
    %1719 = vmatprep.subr.bf16.mxu0 %v1455
    %1720 = vmatpush1.bf16.msra.mxu0 %v1454
    %1721 = vmatprep.subr.bf16.mxu0 %v1459
    %1722 = vmatpush1.bf16.msra.mxu0 %v1458
    %1723 = vmatprep.subr.bf16.mxu0 %v1463
    %1724 = vmatpush1.bf16.msra.mxu0 %v1462
    %1725 = vmatprep.subr.bf16.mxu0 %v1467
    %1726 = vmatpush1.bf16.msra.mxu0 %v1466
    %1727 = vmatprep.subr.bf16.mxu0 %v1471
    %1728 = vmatpush1.bf16.msra.mxu0 %v1470
    %1729 = vmatprep.subr.bf16.mxu0 %v1475
    %1730 = vmatpush1.bf16.msra.mxu0 %v1474
    %1731 = vmatprep.subr.bf16.mxu0 %v1479
    %1732 = vmatpush1.bf16.msra.mxu0 %v1478
    %1733 = vmatprep.subr.bf16.mxu0 %v1483
    %1734 = vmatpush1.bf16.msra.mxu0 %v1482
    %1735 = vmatprep.subr.bf16.mxu0 %v1487
    %1736 = vmatpush1.bf16.msra.mxu0 %v1486
    %1737 = vmatprep.subr.bf16.mxu0 %v1491
    %1738 = vmatpush1.bf16.msra.mxu0 %v1490
    %1739 = vmatprep.subr.bf16.mxu0 %v1495
    %1740 = vmatpush1.bf16.msra.mxu0 %v1494
    %1741 = vmatprep.subr.bf16.mxu0 %v1499
    %1742 = vmatpush1.bf16.msra.mxu0 %v1498
    %1743 = vmatprep.subr.bf16.mxu0 %v1503
    %1744 = vmatpush1.bf16.msra.mxu0 %v1502
    %1745 = vmatprep.subr.bf16.mxu0 %v1507
    %1746 = vmatpush1.bf16.msra.mxu0 %v1506
    %1747 = vmatprep.subr.bf16.mxu0 %v1511
    %1748 = vmatpush1.bf16.msra.mxu0 %v1510
    %1749 = vmatprep.mubr.bf16.mxu0 %v1319
    %1750 = vmatmul.mubr.bf16.gmra.mrb[0].mxu0 %v1318
    %v1751 = vpop.f32.mrb[0].mxu0
    %v1752 = vadd.f32 %v1711, %v1751
    %v1753 = vpop.f32.mrb[0].mxu0
    %v1754 = vadd.f32 %v1713, %v1753
    %v1755 = vpop.f32.mrb[0].mxu0
    %v1756 = vpop.f32.mrb[0].mxu0
    %1757 = vdwg.mxu0
    %v1758 = vld [vmem:[%s11] sm:$0xf]
    %v1760 = vlaneseq
    %v1761 = vshrl.u32 %v1760, 7
    %v1762 = vsub.s32 0, %v1761
    %v1763 = vrot.slane %v1758, %v1762
    %v1764 = vlaneseq
    %v1765 = vshrl.u32 %v1764, 7
    %v1766 = vsub.s32 1, %v1765
    %v1767 = vrot.slane %v1758, %v1766
    %v1768 = vlaneseq
    %v1769 = vshrl.u32 %v1768, 7
    %v1770 = vsub.s32 2, %v1769
    %v1771 = vrot.slane %v1758, %v1770
    %v1772 = vlaneseq
    %v1773 = vshrl.u32 %v1772, 7
    %v1774 = vsub.s32 3, %v1773
    %v1775 = vrot.slane %v1758, %v1774
    %v1780 = vmul.f32 %v1629, %v1763
    %v1781 = vmul.f32 %v1631, %v1767
    %v1782 = vmul.f32 %v1752, %v1771
    %v1783 = vmul.f32 %v1754, %v1775
    %v1784 = vld [vmem:[%s12] sm:$0xf]
    %v1786 = vlaneseq
    %v1787 = vshrl.u32 %v1786, 7
    %v1788 = vsub.s32 0, %v1787
    %v1789 = vrot.slane %v1784, %v1788
    %v1790 = vlaneseq
    %v1791 = vshrl.u32 %v1790, 7
    %v1792 = vsub.s32 1, %v1791
    %v1793 = vrot.slane %v1784, %v1792
    %v1794 = vlaneseq
    %v1795 = vshrl.u32 %v1794, 7
    %v1796 = vsub.s32 2, %v1795
    %v1797 = vrot.slane %v1784, %v1796
    %v1798 = vlaneseq
    %v1799 = vshrl.u32 %v1798, 7
    %v1800 = vsub.s32 3, %v1799
    %v1801 = vrot.slane %v1784, %v1800
    %v1806 = vadd.f32 %v1780, %v1789
    %v1807 = vadd.f32 %v1781, %v1793
    %v1808 = vadd.f32 %v1782, %v1797
    %v1809 = vadd.f32 %v1783, %v1801
    %v1810 = vmax.f32 %v1806, 0.0
    %v1811 = vmax.f32 %v1807, 0.0
    %v1812 = vmax.f32 %v1808, 0.0
    %v1813 = vmax.f32 %v1809, 0.0
    %s1814 = smul.u32 4, 64
    %s1815 = smul.u32 %s1814, 4
    %s1816 = sshll.u32 %s1815, 4
    %1817 = dma.done %s92, %s1816
    %v1818 = vpack.c.bf16 %v1810, %v1810
    %v1819 = vpack.c.bf16 %v1811, %v1811
    %v1820 = vpack.c.bf16 %v1812, %v1812
    %v1821 = vpack.c.bf16 %v1813, %v1813
    %v1822 = vld [vmem:[#allocation4] sm:$0xff]
    %v1823 = vld [vmem:[#allocation4 + $0x8] sm:$0xff]
    %v1824 = vld [vmem:[#allocation4 + $0x10] sm:$0xff]
    %v1825 = vld [vmem:[#allocation4 + $0x18] sm:$0xff]
    %v1826 = vld [vmem:[#allocation4 + $0x20] sm:$0xff]
    %v1827 = vld [vmem:[#allocation4 + $0x28] sm:$0xff]
    %v1828 = vld [vmem:[#allocation4 + $0x30] sm:$0xff]
    %v1829 = vld [vmem:[#allocation4 + $0x38] sm:$0xff]
    %v1830 = vld [vmem:[#allocation4 + $0x40] sm:$0xff]
    %v1831 = vld [vmem:[#allocation4 + $0x48] sm:$0xff]
    %v1832 = vld [vmem:[#allocation4 + $0x50] sm:$0xff]
    %v1833 = vld [vmem:[#allocation4 + $0x58] sm:$0xff]
    %v1834 = vld [vmem:[#allocation4 + $0x60] sm:$0xff]
    %v1835 = vld [vmem:[#allocation4 + $0x68] sm:$0xff]
    %v1836 = vld [vmem:[#allocation4 + $0x70] sm:$0xff]
    %v1837 = vld [vmem:[#allocation4 + $0x78] sm:$0xff]
    %v1838 = vld [vmem:[#allocation4 + $0x80] sm:$0xff]
    %v1839 = vld [vmem:[#allocation4 + $0x88] sm:$0xff]
    %v1840 = vld [vmem:[#allocation4 + $0x90] sm:$0xff]
    %v1841 = vld [vmem:[#allocation4 + $0x98] sm:$0xff]
    %v1842 = vld [vmem:[#allocation4 + $0xa0] sm:$0xff]
    %v1843 = vld [vmem:[#allocation4 + $0xa8] sm:$0xff]
    %v1844 = vld [vmem:[#allocation4 + $0xb0] sm:$0xff]
    %v1845 = vld [vmem:[#allocation4 + $0xb8] sm:$0xff]
    %v1846 = vld [vmem:[#allocation4 + $0xc0] sm:$0xff]
    %v1847 = vld [vmem:[#allocation4 + $0xc8] sm:$0xff]
    %v1848 = vld [vmem:[#allocation4 + $0xd0] sm:$0xff]
    %v1849 = vld [vmem:[#allocation4 + $0xd8] sm:$0xff]
    %v1850 = vld [vmem:[#allocation4 + $0xe0] sm:$0xff]
    %v1851 = vld [vmem:[#allocation4 + $0xe8] sm:$0xff]
    %v1852 = vld [vmem:[#allocation4 + $0xf0] sm:$0xff]
    %v1853 = vld [vmem:[#allocation4 + $0xf8] sm:$0xff]
    %v1854 = vld [vmem:[#allocation4 + $0x100] sm:$0xff]
    %v1855 = vld [vmem:[#allocation4 + $0x108] sm:$0xff]
    %v1856 = vld [vmem:[#allocation4 + $0x110] sm:$0xff]
    %v1857 = vld [vmem:[#allocation4 + $0x118] sm:$0xff]
    %v1858 = vld [vmem:[#allocation4 + $0x120] sm:$0xff]
    %v1859 = vld [vmem:[#allocation4 + $0x128] sm:$0xff]
    %v1860 = vld [vmem:[#allocation4 + $0x130] sm:$0xff]
    %v1861 = vld [vmem:[#allocation4 + $0x138] sm:$0xff]
    %v1862 = vld [vmem:[#allocation4 + $0x140] sm:$0xff]
    %v1863 = vld [vmem:[#allocation4 + $0x148] sm:$0xff]
    %v1864 = vld [vmem:[#allocation4 + $0x150] sm:$0xff]
    %v1865 = vld [vmem:[#allocation4 + $0x158] sm:$0xff]
    %v1866 = vld [vmem:[#allocation4 + $0x160] sm:$0xff]
    %v1867 = vld [vmem:[#allocation4 + $0x168] sm:$0xff]
    %v1868 = vld [vmem:[#allocation4 + $0x170] sm:$0xff]
    %v1869 = vld [vmem:[#allocation4 + $0x178] sm:$0xff]
    %v1870 = vld [vmem:[#allocation4 + $0x180] sm:$0xff]
    %v1871 = vld [vmem:[#allocation4 + $0x188] sm:$0xff]
    %v1872 = vld [vmem:[#allocation4 + $0x190] sm:$0xff]
    %v1873 = vld [vmem:[#allocation4 + $0x198] sm:$0xff]
    %v1874 = vld [vmem:[#allocation4 + $0x1a0] sm:$0xff]
    %v1875 = vld [vmem:[#allocation4 + $0x1a8] sm:$0xff]
    %v1876 = vld [vmem:[#allocation4 + $0x1b0] sm:$0xff]
    %v1877 = vld [vmem:[#allocation4 + $0x1b8] sm:$0xff]
    %v1878 = vld [vmem:[#allocation4 + $0x1c0] sm:$0xff]
    %v1879 = vld [vmem:[#allocation4 + $0x1c8] sm:$0xff]
    %v1880 = vld [vmem:[#allocation4 + $0x1d0] sm:$0xff]
    %v1881 = vld [vmem:[#allocation4 + $0x1d8] sm:$0xff]
    %v1882 = vld [vmem:[#allocation4 + $0x1e0] sm:$0xff]
    %v1883 = vld [vmem:[#allocation4 + $0x1e8] sm:$0xff]
    %v1884 = vld [vmem:[#allocation4 + $0x1f0] sm:$0xff]
    %v1885 = vld [vmem:[#allocation4 + $0x1f8] sm:$0xff]
    %v1886 = vld [vmem:[#allocation4 + $0x200] sm:$0xff]
    %v1887 = vld [vmem:[#allocation4 + $0x208] sm:$0xff]
    %v1888 = vld [vmem:[#allocation4 + $0x210] sm:$0xff]
    %v1889 = vld [vmem:[#allocation4 + $0x218] sm:$0xff]
    %v1890 = vld [vmem:[#allocation4 + $0x220] sm:$0xff]
    %v1891 = vld [vmem:[#allocation4 + $0x228] sm:$0xff]
    %v1892 = vld [vmem:[#allocation4 + $0x230] sm:$0xff]
    %v1893 = vld [vmem:[#allocation4 + $0x238] sm:$0xff]
    %v1894 = vld [vmem:[#allocation4 + $0x240] sm:$0xff]
    %v1895 = vld [vmem:[#allocation4 + $0x248] sm:$0xff]
    %v1896 = vld [vmem:[#allocation4 + $0x250] sm:$0xff]
    %v1897 = vld [vmem:[#allocation4 + $0x258] sm:$0xff]
    %v1898 = vld [vmem:[#allocation4 + $0x260] sm:$0xff]
    %v1899 = vld [vmem:[#allocation4 + $0x268] sm:$0xff]
    %v1900 = vld [vmem:[#allocation4 + $0x270] sm:$0xff]
    %v1901 = vld [vmem:[#allocation4 + $0x278] sm:$0xff]
    %v1902 = vld [vmem:[#allocation4 + $0x280] sm:$0xff]
    %v1903 = vld [vmem:[#allocation4 + $0x288] sm:$0xff]
    %v1904 = vld [vmem:[#allocation4 + $0x290] sm:$0xff]
    %v1905 = vld [vmem:[#allocation4 + $0x298] sm:$0xff]
    %v1906 = vld [vmem:[#allocation4 + $0x2a0] sm:$0xff]
    %v1907 = vld [vmem:[#allocation4 + $0x2a8] sm:$0xff]
    %v1908 = vld [vmem:[#allocation4 + $0x2b0] sm:$0xff]
    %v1909 = vld [vmem:[#allocation4 + $0x2b8] sm:$0xff]
    %v1910 = vld [vmem:[#allocation4 + $0x2c0] sm:$0xff]
    %v1911 = vld [vmem:[#allocation4 + $0x2c8] sm:$0xff]
    %v1912 = vld [vmem:[#allocation4 + $0x2d0] sm:$0xff]
    %v1913 = vld [vmem:[#allocation4 + $0x2d8] sm:$0xff]
    %v1914 = vld [vmem:[#allocation4 + $0x2e0] sm:$0xff]
    %v1915 = vld [vmem:[#allocation4 + $0x2e8] sm:$0xff]
    %v1916 = vld [vmem:[#allocation4 + $0x2f0] sm:$0xff]
    %v1917 = vld [vmem:[#allocation4 + $0x2f8] sm:$0xff]
    %v1918 = vld [vmem:[#allocation4 + $0x300] sm:$0xff]
    %v1919 = vld [vmem:[#allocation4 + $0x308] sm:$0xff]
    %v1920 = vld [vmem:[#allocation4 + $0x310] sm:$0xff]
    %v1921 = vld [vmem:[#allocation4 + $0x318] sm:$0xff]
    %v1922 = vld [vmem:[#allocation4 + $0x320] sm:$0xff]
    %v1923 = vld [vmem:[#allocation4 + $0x328] sm:$0xff]
    %v1924 = vld [vmem:[#allocation4 + $0x330] sm:$0xff]
    %v1925 = vld [vmem:[#allocation4 + $0x338] sm:$0xff]
    %v1926 = vld [vmem:[#allocation4 + $0x340] sm:$0xff]
    %v1927 = vld [vmem:[#allocation4 + $0x348] sm:$0xff]
    %v1928 = vld [vmem:[#allocation4 + $0x350] sm:$0xff]
    %v1929 = vld [vmem:[#allocation4 + $0x358] sm:$0xff]
    %v1930 = vld [vmem:[#allocation4 + $0x360] sm:$0xff]
    %v1931 = vld [vmem:[#allocation4 + $0x368] sm:$0xff]
    %v1932 = vld [vmem:[#allocation4 + $0x370] sm:$0xff]
    %v1933 = vld [vmem:[#allocation4 + $0x378] sm:$0xff]
    %v1934 = vld [vmem:[#allocation4 + $0x380] sm:$0xff]
    %v1935 = vld [vmem:[#allocation4 + $0x388] sm:$0xff]
    %v1936 = vld [vmem:[#allocation4 + $0x390] sm:$0xff]
    %v1937 = vld [vmem:[#allocation4 + $0x398] sm:$0xff]
    %v1938 = vld [vmem:[#allocation4 + $0x3a0] sm:$0xff]
    %v1939 = vld [vmem:[#allocation4 + $0x3a8] sm:$0xff]
    %v1940 = vld [vmem:[#allocation4 + $0x3b0] sm:$0xff]
    %v1941 = vld [vmem:[#allocation4 + $0x3b8] sm:$0xff]
    %v1942 = vld [vmem:[#allocation4 + $0x3c0] sm:$0xff]
    %v1943 = vld [vmem:[#allocation4 + $0x3c8] sm:$0xff]
    %v1944 = vld [vmem:[#allocation4 + $0x3d0] sm:$0xff]
    %v1945 = vld [vmem:[#allocation4 + $0x3d8] sm:$0xff]
    %v1946 = vld [vmem:[#allocation4 + $0x3e0] sm:$0xff]
    %v1947 = vld [vmem:[#allocation4 + $0x3e8] sm:$0xff]
    %v1948 = vld [vmem:[#allocation4 + $0x3f0] sm:$0xff]
    %v1949 = vld [vmem:[#allocation4 + $0x3f8] sm:$0xff]
    %1950 = vmatprep.subr.bf16.mxu0 %v1823
    %1951 = vmatpush1.bf16.msra.mxu0 %v1822
    %1952 = vmatprep.subr.bf16.mxu0 %v1827
    %1953 = vmatpush1.bf16.msra.mxu0 %v1826
    %1954 = vmatprep.subr.bf16.mxu0 %v1831
    %1955 = vmatpush1.bf16.msra.mxu0 %v1830
    %1956 = vmatprep.subr.bf16.mxu0 %v1835
    %1957 = vmatpush1.bf16.msra.mxu0 %v1834
    %1958 = vmatprep.subr.bf16.mxu0 %v1839
    %1959 = vmatpush1.bf16.msra.mxu0 %v1838
    %1960 = vmatprep.subr.bf16.mxu0 %v1843
    %1961 = vmatpush1.bf16.msra.mxu0 %v1842
    %1962 = vmatprep.subr.bf16.mxu0 %v1847
    %1963 = vmatpush1.bf16.msra.mxu0 %v1846
    %1964 = vmatprep.subr.bf16.mxu0 %v1851
    %1965 = vmatpush1.bf16.msra.mxu0 %v1850
    %1966 = vmatprep.subr.bf16.mxu0 %v1855
    %1967 = vmatpush1.bf16.msra.mxu0 %v1854
    %1968 = vmatprep.subr.bf16.mxu0 %v1859
    %1969 = vmatpush1.bf16.msra.mxu0 %v1858
    %1970 = vmatprep.subr.bf16.mxu0 %v1863
    %1971 = vmatpush1.bf16.msra.mxu0 %v1862
    %1972 = vmatprep.subr.bf16.mxu0 %v1867
    %1973 = vmatpush1.bf16.msra.mxu0 %v1866
    %1974 = vmatprep.subr.bf16.mxu0 %v1871
    %1975 = vmatpush1.bf16.msra.mxu0 %v1870
    %1976 = vmatprep.subr.bf16.mxu0 %v1875
    %1977 = vmatpush1.bf16.msra.mxu0 %v1874
    %1978 = vmatprep.subr.bf16.mxu0 %v1879
    %1979 = vmatpush1.bf16.msra.mxu0 %v1878
    %1980 = vmatprep.subr.bf16.mxu0 %v1883
    %1981 = vmatpush1.bf16.msra.mxu0 %v1882
    %1982 = vmatprep.mubr.bf16.mxu0 %v1819
    %1983 = vmatmul.mubr.bf16.gmra.mrb[0].mxu0 %v1818
    %v1984 = vpop.f32.mrb[0].mxu0
    %v1985 = vadd.f32 0.0, %v1984
    %v1986 = vpop.f32.mrb[0].mxu0
    %v1987 = vadd.f32 0.0, %v1986
    %v1988 = vpop.f32.mrb[0].mxu0
    %v1989 = vpop.f32.mrb[0].mxu0
    %1990 = vdwg.mxu0
    %1991 = vmatprep.subr.bf16.mxu0 %v1887
    %1992 = vmatpush1.bf16.msra.mxu0 %v1886
    %1993 = vmatprep.subr.bf16.mxu0 %v1891
    %1994 = vmatpush1.bf16.msra.mxu0 %v1890
    %1995 = vmatprep.subr.bf16.mxu0 %v1895
    %1996 = vmatpush1.bf16.msra.mxu0 %v1894
    %1997 = vmatprep.subr.bf16.mxu0 %v1899
    %1998 = vmatpush1.bf16.msra.mxu0 %v1898
    %1999 = vmatprep.subr.bf16.mxu0 %v1903
    %2000 = vmatpush1.bf16.msra.mxu0 %v1902
    %2001 = vmatprep.subr.bf16.mxu0 %v1907
    %2002 = vmatpush1.bf16.msra.mxu0 %v1906
    %2003 = vmatprep.subr.bf16.mxu0 %v1911
    %2004 = vmatpush1.bf16.msra.mxu0 %v1910
    %2005 = vmatprep.subr.bf16.mxu0 %v1915
    %2006 = vmatpush1.bf16.msra.mxu0 %v1914
    %2007 = vmatprep.subr.bf16.mxu0 %v1919
    %2008 = vmatpush1.bf16.msra.mxu0 %v1918
    %2009 = vmatprep.subr.bf16.mxu0 %v1923
    %2010 = vmatpush1.bf16.msra.mxu0 %v1922
    %2011 = vmatprep.subr.bf16.mxu0 %v1927
    %2012 = vmatpush1.bf16.msra.mxu0 %v1926
    %2013 = vmatprep.subr.bf16.mxu0 %v1931
    %2014 = vmatpush1.bf16.msra.mxu0 %v1930
    %2015 = vmatprep.subr.bf16.mxu0 %v1935
    %2016 = vmatpush1.bf16.msra.mxu0 %v1934
    %2017 = vmatprep.subr.bf16.mxu0 %v1939
    %2018 = vmatpush1.bf16.msra.mxu0 %v1938
    %2019 = vmatprep.subr.bf16.mxu0 %v1943
    %2020 = vmatpush1.bf16.msra.mxu0 %v1942
    %2021 = vmatprep.subr.bf16.mxu0 %v1947
    %2022 = vmatpush1.bf16.msra.mxu0 %v1946
    %2023 = vmatprep.mubr.bf16.mxu0 %v1821
    %2024 = vmatmul.mubr.bf16.gmra.mrb[0].mxu0 %v1820
    %v2025 = vpop.f32.mrb[0].mxu0
    %v2026 = vadd.f32 %v1985, %v2025
    %v2027 = vpop.f32.mrb[0].mxu0
    %v2028 = vadd.f32 %v1987, %v2027
    %v2029 = vpop.f32.mrb[0].mxu0
    %v2030 = vpop.f32.mrb[0].mxu0
    %2031 = vdwg.mxu0
    %2032 = vmatprep.subr.bf16.mxu0 %v1825
    %2033 = vmatpush1.bf16.msra.mxu0 %v1824
    %2034 = vmatprep.subr.bf16.mxu0 %v1829
    %2035 = vmatpush1.bf16.msra.mxu0 %v1828
    %2036 = vmatprep.subr.bf16.mxu0 %v1833
    %2037 = vmatpush1.bf16.msra.mxu0 %v1832
    %2038 = vmatprep.subr.bf16.mxu0 %v1837
    %2039 = vmatpush1.bf16.msra.mxu0 %v1836
    %2040 = vmatprep.subr.bf16.mxu0 %v1841
    %2041 = vmatpush1.bf16.msra.mxu0 %v1840
    %2042 = vmatprep.subr.bf16.mxu0 %v1845
    %2043 = vmatpush1.bf16.msra.mxu0 %v1844
    %2044 = vmatprep.subr.bf16.mxu0 %v1849
    %2045 = vmatpush1.bf16.msra.mxu0 %v1848
    %2046 = vmatprep.subr.bf16.mxu0 %v1853
    %2047 = vmatpush1.bf16.msra.mxu0 %v1852
    %2048 = vmatprep.subr.bf16.mxu0 %v1857
    %2049 = vmatpush1.bf16.msra.mxu0 %v1856
    %2050 = vmatprep.subr.bf16.mxu0 %v1861
    %2051 = vmatpush1.bf16.msra.mxu0 %v1860
    %2052 = vmatprep.subr.bf16.mxu0 %v1865
    %2053 = vmatpush1.bf16.msra.mxu0 %v1864
    %2054 = vmatprep.subr.bf16.mxu0 %v1869
    %2055 = vmatpush1.bf16.msra.mxu0 %v1868
    %2056 = vmatprep.subr.bf16.mxu0 %v1873
    %2057 = vmatpush1.bf16.msra.mxu0 %v1872
    %2058 = vmatprep.subr.bf16.mxu0 %v1877
    %2059 = vmatpush1.bf16.msra.mxu0 %v1876
    %2060 = vmatprep.subr.bf16.mxu0 %v1881
    %2061 = vmatpush1.bf16.msra.mxu0 %v1880
    %2062 = vmatprep.subr.bf16.mxu0 %v1885
    %2063 = vmatpush1.bf16.msra.mxu0 %v1884
    %2064 = vmatprep.mubr.bf16.mxu0 %v1819
    %2065 = vmatmul.mubr.bf16.gmra.mrb[0].mxu0 %v1818
    %v2066 = vpop.f32.mrb[0].mxu0
    %v2067 = vadd.f32 0.0, %v2066
    %v2068 = vpop.f32.mrb[0].mxu0
    %v2069 = vadd.f32 0.0, %v2068
    %v2070 = vpop.f32.mrb[0].mxu0
    %v2071 = vpop.f32.mrb[0].mxu0
    %2072 = vdwg.mxu0
    %2073 = vmatprep.subr.bf16.mxu0 %v1889
    %2074 = vmatpush1.bf16.msra.mxu0 %v1888
    %2075 = vmatprep.subr.bf16.mxu0 %v1893
    %2076 = vmatpush1.bf16.msra.mxu0 %v1892
    %2077 = vmatprep.subr.bf16.mxu0 %v1897
    %2078 = vmatpush1.bf16.msra.mxu0 %v1896
    %2079 = vmatprep.subr.bf16.mxu0 %v1901
    %2080 = vmatpush1.bf16.msra.mxu0 %v1900
    %2081 = vmatprep.subr.bf16.mxu0 %v1905
    %2082 = vmatpush1.bf16.msra.mxu0 %v1904
    %2083 = vmatprep.subr.bf16.mxu0 %v1909
    %2084 = vmatpush1.bf16.msra.mxu0 %v1908
    %2085 = vmatprep.subr.bf16.mxu0 %v1913
    %2086 = vmatpush1.bf16.msra.mxu0 %v1912
    %2087 = vmatprep.subr.bf16.mxu0 %v1917
    %2088 = vmatpush1.bf16.msra.mxu0 %v1916
    %2089 = vmatprep.subr.bf16.mxu0 %v1921
    %2090 = vmatpush1.bf16.msra.mxu0 %v1920
    %2091 = vmatprep.subr.bf16.mxu0 %v1925
    %2092 = vmatpush1.bf16.msra.mxu0 %v1924
    %2093 = vmatprep.subr.bf16.mxu0 %v1929
    %2094 = vmatpush1.bf16.msra.mxu0 %v1928
    %2095 = vmatprep.subr.bf16.mxu0 %v1933
    %2096 = vmatpush1.bf16.msra.mxu0 %v1932
    %2097 = vmatprep.subr.bf16.mxu0 %v1937
    %2098 = vmatpush1.bf16.msra.mxu0 %v1936
    %2099 = vmatprep.subr.bf16.mxu0 %v1941
    %2100 = vmatpush1.bf16.msra.mxu0 %v1940
    %2101 = vmatprep.subr.bf16.mxu0 %v1945
    %2102 = vmatpush1.bf16.msra.mxu0 %v1944
    %2103 = vmatprep.subr.bf16.mxu0 %v1949
    %2104 = vmatpush1.bf16.msra.mxu0 %v1948
    %2105 = vmatprep.mubr.bf16.mxu0 %v1821
    %2106 = vmatmul.mubr.bf16.gmra.mrb[0].mxu0 %v1820
    %v2107 = vpop.f32.mrb[0].mxu0
    %v2108 = vadd.f32 %v2067, %v2107
    %v2109 = vpop.f32.mrb[0].mxu0
    %v2110 = vadd.f32 %v2069, %v2109
    %v2111 = vpop.f32.mrb[0].mxu0
    %v2112 = vpop.f32.mrb[0].mxu0
    %2113 = vdwg.mxu0
    %v2114 = vld [vmem:[%s14] sm:$0xf]
    %v2116 = vlaneseq
    %v2117 = vshrl.u32 %v2116, 7
    %v2118 = vsub.s32 0, %v2117
    %v2119 = vrot.slane %v2114, %v2118
    %v2120 = vlaneseq
    %v2121 = vshrl.u32 %v2120, 7
    %v2122 = vsub.s32 1, %v2121
    %v2123 = vrot.slane %v2114, %v2122
    %v2124 = vlaneseq
    %v2125 = vshrl.u32 %v2124, 7
    %v2126 = vsub.s32 2, %v2125
    %v2127 = vrot.slane %v2114, %v2126
    %v2128 = vlaneseq
    %v2129 = vshrl.u32 %v2128, 7
    %v2130 = vsub.s32 3, %v2129
    %v2131 = vrot.slane %v2114, %v2130
    %v2136 = vmul.f32 %v2026, %v2119
    %v2137 = vmul.f32 %v2028, %v2123
    %v2138 = vmul.f32 %v2108, %v2127
    %v2139 = vmul.f32 %v2110, %v2131
    %v2140 = vld [vmem:[%s15] sm:$0xf]
    %v2142 = vlaneseq
    %v2143 = vshrl.u32 %v2142, 7
    %v2144 = vsub.s32 0, %v2143
    %v2145 = vrot.slane %v2140, %v2144
    %v2146 = vlaneseq
    %v2147 = vshrl.u32 %v2146, 7
    %v2148 = vsub.s32 1, %v2147
    %v2149 = vrot.slane %v2140, %v2148
    %v2150 = vlaneseq
    %v2151 = vshrl.u32 %v2150, 7
    %v2152 = vsub.s32 2, %v2151
    %v2153 = vrot.slane %v2140, %v2152
    %v2154 = vlaneseq
    %v2155 = vshrl.u32 %v2154, 7
    %v2156 = vsub.s32 3, %v2155
    %v2157 = vrot.slane %v2140, %v2156
    %v2162 = vadd.f32 %v2136, %v2145
    %v2163 = vadd.f32 %v2137, %v2149
    %v2164 = vadd.f32 %v2138, %v2153
    %v2165 = vadd.f32 %v2139, %v2157
    %v2166 = vmax.f32 %v2162, 0.0
    %v2167 = vmax.f32 %v2163, 0.0
    %v2168 = vmax.f32 %v2164, 0.0
    %v2169 = vmax.f32 %v2165, 0.0
    %v2170 = vpack.c.bf16 %v2166, %v2166
    %v2171 = vpack.c.bf16 %v2167, %v2167
    %v2172 = vpack.c.bf16 %v2168, %v2168
    %v2173 = vpack.c.bf16 %v2169, %v2169
    %v2174 = vld [vmem:[%s16] sm:$0xf]
    %v2175 = vld [vmem:[%s16 + $0x4] sm:$0xf]
    %v2176 = vld [vmem:[%s16 + $0x8] sm:$0xf]
    %v2177 = vld [vmem:[%s16 + $0xc] sm:$0xf]
    %v2178 = vld [vmem:[%s16 + $0x10] sm:$0xf]
    %v2179 = vld [vmem:[%s16 + $0x14] sm:$0xf]
    %v2180 = vld [vmem:[%s16 + $0x18] sm:$0xf]
    %v2181 = vld [vmem:[%s16 + $0x1c] sm:$0xf]
    %v2182 = vld [vmem:[%s16 + $0x20] sm:$0xf]
    %v2183 = vld [vmem:[%s16 + $0x24] sm:$0xf]
    %v2184 = vld [vmem:[%s16 + $0x28] sm:$0xf]
    %v2185 = vld [vmem:[%s16 + $0x2c] sm:$0xf]
    %v2186 = vld [vmem:[%s16 + $0x30] sm:$0xf]
    %v2187 = vld [vmem:[%s16 + $0x34] sm:$0xf]
    %v2188 = vld [vmem:[%s16 + $0x38] sm:$0xf]
    %v2189 = vld [vmem:[%s16 + $0x3c] sm:$0xf]
    %v2190 = vld [vmem:[%s16 + $0x40] sm:$0xf]
    %v2191 = vld [vmem:[%s16 + $0x44] sm:$0xf]
    %v2192 = vld [vmem:[%s16 + $0x48] sm:$0xf]
    %v2193 = vld [vmem:[%s16 + $0x4c] sm:$0xf]
    %v2194 = vld [vmem:[%s16 + $0x50] sm:$0xf]
    %v2195 = vld [vmem:[%s16 + $0x54] sm:$0xf]
    %v2196 = vld [vmem:[%s16 + $0x58] sm:$0xf]
    %v2197 = vld [vmem:[%s16 + $0x5c] sm:$0xf]
    %v2198 = vld [vmem:[%s16 + $0x60] sm:$0xf]
    %v2199 = vld [vmem:[%s16 + $0x64] sm:$0xf]
    %v2200 = vld [vmem:[%s16 + $0x68] sm:$0xf]
    %v2201 = vld [vmem:[%s16 + $0x6c] sm:$0xf]
    %v2202 = vld [vmem:[%s16 + $0x70] sm:$0xf]
    %v2203 = vld [vmem:[%s16 + $0x74] sm:$0xf]
    %v2204 = vld [vmem:[%s16 + $0x78] sm:$0xf]
    %v2205 = vld [vmem:[%s16 + $0x7c] sm:$0xf]
    %v2206 = vld [vmem:[%s16 + $0x80] sm:$0xf]
    %v2207 = vld [vmem:[%s16 + $0x84] sm:$0xf]
    %v2208 = vld [vmem:[%s16 + $0x88] sm:$0xf]
    %v2209 = vld [vmem:[%s16 + $0x8c] sm:$0xf]
    %v2210 = vld [vmem:[%s16 + $0x90] sm:$0xf]
    %v2211 = vld [vmem:[%s16 + $0x94] sm:$0xf]
    %v2212 = vld [vmem:[%s16 + $0x98] sm:$0xf]
    %v2213 = vld [vmem:[%s16 + $0x9c] sm:$0xf]
    %v2214 = vld [vmem:[%s16 + $0xa0] sm:$0xf]
    %v2215 = vld [vmem:[%s16 + $0xa4] sm:$0xf]
    %v2216 = vld [vmem:[%s16 + $0xa8] sm:$0xf]
    %v2217 = vld [vmem:[%s16 + $0xac] sm:$0xf]
    %v2218 = vld [vmem:[%s16 + $0xb0] sm:$0xf]
    %v2219 = vld [vmem:[%s16 + $0xb4] sm:$0xf]
    %v2220 = vld [vmem:[%s16 + $0xb8] sm:$0xf]
    %v2221 = vld [vmem:[%s16 + $0xbc] sm:$0xf]
    %v2222 = vld [vmem:[%s16 + $0xc0] sm:$0xf]
    %v2223 = vld [vmem:[%s16 + $0xc4] sm:$0xf]
    %v2224 = vld [vmem:[%s16 + $0xc8] sm:$0xf]
    %v2225 = vld [vmem:[%s16 + $0xcc] sm:$0xf]
    %v2226 = vld [vmem:[%s16 + $0xd0] sm:$0xf]
    %v2227 = vld [vmem:[%s16 + $0xd4] sm:$0xf]
    %v2228 = vld [vmem:[%s16 + $0xd8] sm:$0xf]
    %v2229 = vld [vmem:[%s16 + $0xdc] sm:$0xf]
    %v2230 = vld [vmem:[%s16 + $0xe0] sm:$0xf]
    %v2231 = vld [vmem:[%s16 + $0xe4] sm:$0xf]
    %v2232 = vld [vmem:[%s16 + $0xe8] sm:$0xf]
    %v2233 = vld [vmem:[%s16 + $0xec] sm:$0xf]
    %v2234 = vld [vmem:[%s16 + $0xf0] sm:$0xf]
    %v2235 = vld [vmem:[%s16 + $0xf4] sm:$0xf]
    %v2236 = vld [vmem:[%s16 + $0xf8] sm:$0xf]
    %v2237 = vld [vmem:[%s16 + $0xfc] sm:$0xf]
    %v2238 = vld [vmem:[%s17] sm:$0x1]
    %v2240 = vlaneseq
    %v2241 = vshrl.u32 %v2240, 7
    %v2242 = vsub.s32 0, %v2241
    %v2243 = vrot.slane %v2238, %v2242
    %v2309 = vunpack.c.l.b16 %v2174
    %v2310 = vunpack.c.l.b16 %v2175
    %v2311 = vunpack.c.l.b16 %v2176
    %v2312 = vunpack.c.l.b16 %v2177
    %v2313 = vunpack.c.l.b16 %v2178
    %v2314 = vunpack.c.l.b16 %v2179
    %v2315 = vunpack.c.l.b16 %v2180
    %v2316 = vunpack.c.l.b16 %v2181
    %v2317 = vunpack.c.l.b16 %v2182
    %v2318 = vunpack.c.l.b16 %v2183
    %v2319 = vunpack.c.l.b16 %v2184
    %v2320 = vunpack.c.l.b16 %v2185
    %v2321 = vunpack.c.l.b16 %v2186
    %v2322 = vunpack.c.l.b16 %v2187
    %v2323 = vunpack.c.l.b16 %v2188
    %v2324 = vunpack.c.l.b16 %v2189
    %v2325 = vunpack.c.l.b16 %v2190
    %v2326 = vunpack.c.l.b16 %v2191
    %v2327 = vunpack.c.l.b16 %v2192
    %v2328 = vunpack.c.l.b16 %v2193
    %v2329 = vunpack.c.l.b16 %v2194
    %v2330 = vunpack.c.l.b16 %v2195
    %v2331 = vunpack.c.l.b16 %v2196
    %v2332 = vunpack.c.l.b16 %v2197
    %v2333 = vunpack.c.l.b16 %v2198
    %v2334 = vunpack.c.l.b16 %v2199
    %v2335 = vunpack.c.l.b16 %v2200
    %v2336 = vunpack.c.l.b16 %v2201
    %v2337 = vunpack.c.l.b16 %v2202
    %v2338 = vunpack.c.l.b16 %v2203
    %v2339 = vunpack.c.l.b16 %v2204
    %v2340 = vunpack.c.l.b16 %v2205
    %v2341 = vunpack.c.l.b16 %v2206
    %v2342 = vunpack.c.l.b16 %v2207
    %v2343 = vunpack.c.l.b16 %v2208
    %v2344 = vunpack.c.l.b16 %v2209
    %v2345 = vunpack.c.l.b16 %v2210
    %v2346 = vunpack.c.l.b16 %v2211
    %v2347 = vunpack.c.l.b16 %v2212
    %v2348 = vunpack.c.l.b16 %v2213
    %v2349 = vunpack.c.l.b16 %v2214
    %v2350 = vunpack.c.l.b16 %v2215
    %v2351 = vunpack.c.l.b16 %v2216
    %v2352 = vunpack.c.l.b16 %v2217
    %v2353 = vunpack.c.l.b16 %v2218
    %v2354 = vunpack.c.l.b16 %v2219
    %v2355 = vunpack.c.l.b16 %v2220
    %v2356 = vunpack.c.l.b16 %v2221
    %v2357 = vunpack.c.l.b16 %v2222
    %v2358 = vunpack.c.l.b16 %v2223
    %v2359 = vunpack.c.l.b16 %v2224
    %v2360 = vunpack.c.l.b16 %v2225
    %v2361 = vunpack.c.l.b16 %v2226
    %v2362 = vunpack.c.l.b16 %v2227
    %v2363 = vunpack.c.l.b16 %v2228
    %v2364 = vunpack.c.l.b16 %v2229
    %v2365 = vunpack.c.l.b16 %v2230
    %v2366 = vunpack.c.l.b16 %v2231
    %v2367 = vunpack.c.l.b16 %v2232
    %v2368 = vunpack.c.l.b16 %v2233
    %v2369 = vunpack.c.l.b16 %v2234
    %v2370 = vunpack.c.l.b16 %v2235
    %v2371 = vunpack.c.l.b16 %v2236
    %v2372 = vunpack.c.l.b16 %v2237
    %v2373 = vpack.c.b16 %v2310, %v2309
    %v2374 = vpack.c.b16 %v2312, %v2311
    %v2375 = vpack.c.b16 %v2314, %v2313
    %v2376 = vpack.c.b16 %v2316, %v2315
    %v2377 = vpack.c.b16 %v2318, %v2317
    %v2378 = vpack.c.b16 %v2320, %v2319
    %v2379 = vpack.c.b16 %v2322, %v2321
    %v2380 = vpack.c.b16 %v2324, %v2323
    %v2381 = vpack.c.b16 %v2326, %v2325
    %v2382 = vpack.c.b16 %v2328, %v2327
    %v2383 = vpack.c.b16 %v2330, %v2329
    %v2384 = vpack.c.b16 %v2332, %v2331
    %v2385 = vpack.c.b16 %v2334, %v2333
    %v2386 = vpack.c.b16 %v2336, %v2335
    %v2387 = vpack.c.b16 %v2338, %v2337
    %v2388 = vpack.c.b16 %v2340, %v2339
    %v2389 = vpack.c.b16 %v2342, %v2341
    %v2390 = vpack.c.b16 %v2344, %v2343
    %v2391 = vpack.c.b16 %v2346, %v2345
    %v2392 = vpack.c.b16 %v2348, %v2347
    %v2393 = vpack.c.b16 %v2350, %v2349
    %v2394 = vpack.c.b16 %v2352, %v2351
    %v2395 = vpack.c.b16 %v2354, %v2353
    %v2396 = vpack.c.b16 %v2356, %v2355
    %v2397 = vpack.c.b16 %v2358, %v2357
    %v2398 = vpack.c.b16 %v2360, %v2359
    %v2399 = vpack.c.b16 %v2362, %v2361
    %v2400 = vpack.c.b16 %v2364, %v2363
    %v2401 = vpack.c.b16 %v2366, %v2365
    %v2402 = vpack.c.b16 %v2368, %v2367
    %v2403 = vpack.c.b16 %v2370, %v2369
    %v2404 = vpack.c.b16 %v2372, %v2371
    %2437 = vmatprep.subr.bf16.mxu0 0
    %2438 = vmatpush1.bf16.msra.mxu0 %v2373
    %2439 = vmatprep.subr.bf16.mxu0 0
    %2440 = vmatpush1.bf16.msra.mxu0 %v2374
    %2441 = vmatprep.subr.bf16.mxu0 0
    %2442 = vmatpush1.bf16.msra.mxu0 %v2375
    %2443 = vmatprep.subr.bf16.mxu0 0
    %2444 = vmatpush1.bf16.msra.mxu0 %v2376
    %2445 = vmatprep.subr.bf16.mxu0 0
    %2446 = vmatpush1.bf16.msra.mxu0 %v2377
    %2447 = vmatprep.subr.bf16.mxu0 0
    %2448 = vmatpush1.bf16.msra.mxu0 %v2378
    %2449 = vmatprep.subr.bf16.mxu0 0
    %2450 = vmatpush1.bf16.msra.mxu0 %v2379
    %2451 = vmatprep.subr.bf16.mxu0 0
    %2452 = vmatpush1.bf16.msra.mxu0 %v2380
    %2453 = vmatprep.subr.bf16.mxu0 0
    %2454 = vmatpush1.bf16.msra.mxu0 %v2381
    %2455 = vmatprep.subr.bf16.mxu0 0
    %2456 = vmatpush1.bf16.msra.mxu0 %v2382
    %2457 = vmatprep.subr.bf16.mxu0 0
    %2458 = vmatpush1.bf16.msra.mxu0 %v2383
    %2459 = vmatprep.subr.bf16.mxu0 0
    %2460 = vmatpush1.bf16.msra.mxu0 %v2384
    %2461 = vmatprep.subr.bf16.mxu0 0
    %2462 = vmatpush1.bf16.msra.mxu0 %v2385
    %2463 = vmatprep.subr.bf16.mxu0 0
    %2464 = vmatpush1.bf16.msra.mxu0 %v2386
    %2465 = vmatprep.subr.bf16.mxu0 0
    %2466 = vmatpush1.bf16.msra.mxu0 %v2387
    %2467 = vmatprep.subr.bf16.mxu0 0
    %2468 = vmatpush1.bf16.msra.mxu0 %v2388
    %2469 = vmatprep.mubr.bf16.mxu0 %v2171
    %2470 = vmatmul.mubr.bf16.gmra.mrb[0].mxu0 %v2170
    %v2471 = vpop.f32.mrb[0].mxu0
    %v2472 = vadd.f32 %v2243, %v2471
    %v2473 = vpop.f32.mrb[0].mxu0
    %v2474 = vpop.f32.mrb[0].mxu0
    %v2475 = vpop.f32.mrb[0].mxu0
    %2476 = vdwg.mxu0
    %2477 = vmatprep.subr.bf16.mxu0 0
    %2478 = vmatpush1.bf16.msra.mxu0 %v2389
    %2479 = vmatprep.subr.bf16.mxu0 0
    %2480 = vmatpush1.bf16.msra.mxu0 %v2390
    %2481 = vmatprep.subr.bf16.mxu0 0
    %2482 = vmatpush1.bf16.msra.mxu0 %v2391
    %2483 = vmatprep.subr.bf16.mxu0 0
    %2484 = vmatpush1.bf16.msra.mxu0 %v2392
    %2485 = vmatprep.subr.bf16.mxu0 0
    %2486 = vmatpush1.bf16.msra.mxu0 %v2393
    %2487 = vmatprep.subr.bf16.mxu0 0
    %2488 = vmatpush1.bf16.msra.mxu0 %v2394
    %2489 = vmatprep.subr.bf16.mxu0 0
    %2490 = vmatpush1.bf16.msra.mxu0 %v2395
    %2491 = vmatprep.subr.bf16.mxu0 0
    %2492 = vmatpush1.bf16.msra.mxu0 %v2396
    %2493 = vmatprep.subr.bf16.mxu0 0
    %2494 = vmatpush1.bf16.msra.mxu0 %v2397
    %2495 = vmatprep.subr.bf16.mxu0 0
    %2496 = vmatpush1.bf16.msra.mxu0 %v2398
    %2497 = vmatprep.subr.bf16.mxu0 0
    %2498 = vmatpush1.bf16.msra.mxu0 %v2399
    %2499 = vmatprep.subr.bf16.mxu0 0
    %2500 = vmatpush1.bf16.msra.mxu0 %v2400
    %2501 = vmatprep.subr.bf16.mxu0 0
    %2502 = vmatpush1.bf16.msra.mxu0 %v2401
    %2503 = vmatprep.subr.bf16.mxu0 0
    %2504 = vmatpush1.bf16.msra.mxu0 %v2402
    %2505 = vmatprep.subr.bf16.mxu0 0
    %2506 = vmatpush1.bf16.msra.mxu0 %v2403
    %2507 = vmatprep.subr.bf16.mxu0 0
    %2508 = vmatpush1.bf16.msra.mxu0 %v2404
    %2509 = vmatprep.mubr.bf16.mxu0 %v2173
    %2510 = vmatmul.mubr.bf16.gmra.mrb[0].mxu0 %v2172
    %v2511 = vpop.f32.mrb[0].mxu0
    %v2512 = vadd.f32 %v2472, %v2511
    %v2513 = vpop.f32.mrb[0].mxu0
    %v2514 = vpop.f32.mrb[0].mxu0
    %v2515 = vpop.f32.mrb[0].mxu0
    %2516 = vdwg.mxu0
    %vm2517 = vcmask 33792
    %v2518 = vsel %vm2517, %v2512, -inf
    %2519 = vmax.xlane.f32.xlu0 %v2518
    %v2520 = vpop.xlane.xlu0 %2519
    %v2521 = vsub.f32 %v2512, %v2520
    %v2522 = vmul.f32 %v2521, 1.442695
    %v2523 = vpow.pop %v2522
    %v2524 = vsel %vm2517, %v2523, 0.0
    %2525 = vadd.xlane.f32.xlu0 %v2524
    %v2526 = vpop.xlane.xlu0 %2525
    %v2527 = vrcp.pop %v2526
    %v2528 = vmul.f32 %v2523, %v2527
    %2529 = vst.msk [vmem:[#allocation9] sm:$0x3] %vm2517, %v2528
    // Predicated region
    $region66: #{tpu_custom_call.1} parent=1 // pred_check
      _
    $region67: #{tpu_custom_call.1} parent=1 // pred_check_branch
      %2531 = sbr.rel (0) target = $region69
    $region68: #{tpu_custom_call.1} parent=1 // pred_region
      %s2533 = ssub.s32 32, 32
      %2534 = vsyncadd [#allocation10], %s2533
      %s2536 = sshll.u32 [#allocation9], 4
      %s2537 = int_to_ptr.vmem [resolvable:$true] %s2536
      %2539 = dma.vmem_to_hbm [thread:$0]  %s2537, 32, %s18, [#allocation10]
    $region69: #{tpu_custom_call.1} parent=1 // pred_fallthru
      _
    // Predicated region
    $region70: #{tpu_custom_call.1} parent=1 // pred_check
      _
    $region71: #{tpu_custom_call.1} parent=1 // pred_check_branch
      %2541 = sbr.rel (0) target = $region73
    $region72: #{tpu_custom_call.1} parent=1 // pred_region
      %2542 = dma.done [#allocation10], 32
    $region73: #{tpu_custom_call.1} parent=1 // pred_fallthru
      _
    %2543 = vsyncpa [#allocation10], 1
  %2544 = vsyncmov [#allocation8]
  %s2545 = vpop.sfrf %2544
  %p2546 = scmp.eq.s32.totalorder %s2545, 0
  %p2547 = pneg %p2546
  %2549 = shalt.err (%p2547)
  %s2550 = scalar_lea.sflag [#allocation8], 1
  %2551 = vsyncmov %s2550
  %s2552 = vpop.sfrf %2551
  %p2553 = scmp.eq.s32.totalorder %s2552, 0
  %p2554 = pneg %p2553
  %2556 = shalt.err (%p2554)

</llo_original>
